<compile_context>
chip_gen: v7x
topology: tpu7x:2x2x1
jax: 0.10.0
libtpu: 0.0.40
codegen_flags: <defaults>
</compile_context>

<pallas_src>
import functools
import math

import jax
import jax.numpy as jnp
from jax.experimental import pallas as pl
from jax.experimental.pallas import tpu as pltpu


# ----------------------------- tiling helpers ------------------------------

# Keep <= ~48 MiB so the same tile configs fit v7x's 64 MiB VMEM per TC while
# still raising the 16/32 MiB scoped defaults on v5e/v6e.
VMEM_LIMIT_BYTES = 48 * 1024 * 1024

_LANE_TILES = (512, 256, 128)            # last (lane) dim: multiple of 128 or full
_ROW_TILES = (256, 128, 64, 32, 16, 8)   # sublane dim: multiple of 8 or full


def _pick_tile(dim, candidates):
    for c in candidates:
        if dim >= c and dim % c == 0:
            return c
    return dim  # fall back to the full dimension (always legal)


def _cparams(semantics):
    return pltpu.CompilerParams(dimension_semantics=semantics,
                                vmem_limit_bytes=VMEM_LIMIT_BYTES)


# ----------------------------- Pallas kernels ------------------------------

def _rms_matmul_kernel(x_ref, g_ref, w_ref, o_ref, *, eps):
    """o = RMSNorm(x; g) @ w  — norm fused into the matmul prologue (f32 math)."""
    x = x_ref[...].astype(jnp.float32)                      # (tm, K) full-K tile
    var = jnp.mean(x * x, axis=-1, keepdims=True)
    xn = x * jax.lax.rsqrt(var + eps) * g_ref[...].astype(jnp.float32)
    o_ref[...] = jnp.dot(xn.astype(jnp.bfloat16), w_ref[...],
                         preferred_element_type=jnp.float32).astype(o_ref.dtype)


def rms_matmul(x, gamma, w, out_dtype=jnp.bfloat16, eps=1e-6):
    """x: (M, K) bf16, gamma: (K,), w: (K, N) bf16 -> (M, N)."""
    M, K = x.shape
    K2, N = w.shape
    assert K == K2
    g2d = gamma.reshape(1, K).astype(jnp.float32)
    tm = _pick_tile(M, _ROW_TILES)
    tn = _pick_tile(N, _LANE_TILES)
    return pl.pallas_call(
        functools.partial(_rms_matmul_kernel, eps=eps),
        out_shape=jax.ShapeDtypeStruct((M, N), out_dtype),
        grid=(M // tm, N // tn),
        in_specs=[pl.BlockSpec((tm, K), lambda i, j: (i, 0)),
                  pl.BlockSpec((1, K), lambda i, j: (0, 0)),
                  pl.BlockSpec((K, tn), lambda i, j: (0, j))],
        out_specs=pl.BlockSpec((tm, tn), lambda i, j: (i, j)),
        compiler_params=_cparams(("parallel", "parallel")),
    )(x, g2d, w)


def _matmul_residual_kernel(x_ref, w_ref, r_ref, y_ref, s_ref):
    """y = x @ w ; s = y + r  (residual add fused into the matmul epilogue)."""
    y = jnp.dot(x_ref[...], w_ref[...], preferred_element_type=jnp.float32)
    y_ref[...] = y.astype(y_ref.dtype)
    s_ref[...] = (y + r_ref[...].astype(jnp.float32)).astype(s_ref.dtype)


def matmul_residual(x, w, r, out_dtype=jnp.bfloat16):
    """x: (M, K), w: (K, N), r: (M, N) -> (x@w, x@w + r)."""
    M, K = x.shape
    _, N = w.shape
    tm = _pick_tile(M, _ROW_TILES)
    tn = _pick_tile(N, _LANE_TILES)
    return pl.pallas_call(
        _matmul_residual_kernel,
        out_shape=(jax.ShapeDtypeStruct((M, N), out_dtype),
                   jax.ShapeDtypeStruct((M, N), out_dtype)),
        grid=(M // tm, N // tn),
        in_specs=[pl.BlockSpec((tm, K), lambda i, j: (i, 0)),
                  pl.BlockSpec((K, tn), lambda i, j: (0, j)),
                  pl.BlockSpec((tm, tn), lambda i, j: (i, j))],
        out_specs=(pl.BlockSpec((tm, tn), lambda i, j: (i, j)),
                   pl.BlockSpec((tm, tn), lambda i, j: (i, j))),
        compiler_params=_cparams(("parallel", "parallel")),
    )(x, w, r)


def _rms_swiglu_kernel(x_ref, g_ref, wg_ref, wu_ref, o_ref, *, eps):
    """o = silu(RMSNorm(x)@wg) * (RMSNorm(x)@wu) — norm prologue + SwiGLU epilogue."""
    x = x_ref[...].astype(jnp.float32)
    var = jnp.mean(x * x, axis=-1, keepdims=True)
    xn = (x * jax.lax.rsqrt(var + eps)
          * g_ref[...].astype(jnp.float32)).astype(jnp.bfloat16)
    gate = jnp.dot(xn, wg_ref[...], preferred_element_type=jnp.float32)
    up = jnp.dot(xn, wu_ref[...], preferred_element_type=jnp.float32)
    o_ref[...] = (gate * jax.nn.sigmoid(gate) * up).astype(o_ref.dtype)


def rms_swiglu(x, gamma, wg, wu, out_dtype=jnp.bfloat16, eps=1e-6):
    """x: (M, K), gamma: (K,), wg/wu: (K, I) -> (M, I)."""
    M, K = x.shape
    _, N = wg.shape
    g2d = gamma.reshape(1, K).astype(jnp.float32)
    tm = _pick_tile(M, _ROW_TILES)
    tn = _pick_tile(N, _LANE_TILES)
    return pl.pallas_call(
        functools.partial(_rms_swiglu_kernel, eps=eps),
        out_shape=jax.ShapeDtypeStruct((M, N), out_dtype),
        grid=(M // tm, N // tn),
        in_specs=[pl.BlockSpec((tm, K), lambda i, j: (i, 0)),
                  pl.BlockSpec((1, K), lambda i, j: (0, 0)),
                  pl.BlockSpec((K, tn), lambda i, j: (0, j)),
                  pl.BlockSpec((K, tn), lambda i, j: (0, j))],
        out_specs=pl.BlockSpec((tm, tn), lambda i, j: (i, j)),
        compiler_params=_cparams(("parallel", "parallel")),
    )(x, g2d, wg, wu)


def _rmsnorm_kernel(x_ref, g_ref, o_ref, *, eps):
    x = x_ref[...].astype(jnp.float32)
    var = jnp.mean(x * x, axis=-1, keepdims=True)
    o_ref[...] = (x * jax.lax.rsqrt(var + eps)
                  * g_ref[...].astype(jnp.float32)).astype(o_ref.dtype)


def rmsnorm(x2d, gamma, eps=1e-6, out_dtype=jnp.float32):
    """LlamaRMSNorm.  x2d: (M, H), gamma: (H,)."""
    M, H = x2d.shape
    g2d = gamma.reshape(1, H).astype(jnp.float32)
    tm = _pick_tile(M, _ROW_TILES)
    return pl.pallas_call(
        functools.partial(_rmsnorm_kernel, eps=eps),
        out_shape=jax.ShapeDtypeStruct((M, H), out_dtype),
        grid=(M // tm,),
        in_specs=[pl.BlockSpec((tm, H), lambda i: (i, 0)),
                  pl.BlockSpec((1, H), lambda i: (0, 0))],
        out_specs=pl.BlockSpec((tm, H), lambda i: (i, 0)),
        compiler_params=_cparams(("parallel",)),
    )(x2d, g2d)


def _flash_attn_kernel(q_ref, k_ref, v_ref, o_ref, m_sc, l_sc, acc_sc,
                       *, scale, tq, tk):
    """Flash-style causal attention: online softmax, no S x S materialization."""
    qi = pl.program_id(1)
    ki = pl.program_id(2)

    @pl.when(ki == 0)
    def _init():
        m_sc[...] = jnp.full(m_sc.shape, -jnp.inf, m_sc.dtype)
        l_sc[...] = jnp.zeros(l_sc.shape, l_sc.dtype)
        acc_sc[...] = jnp.zeros(acc_sc.shape, acc_sc.dtype)

    # Causal tile skip: kv tiles strictly above the diagonal contribute nothing.
    @pl.when(ki * tk < (qi + 1) * tq)
    def _compute():
        q = q_ref[0]                                   # (tq, D) bf16
        k = k_ref[0]                                   # (tk, D) bf16
        v = v_ref[0]                                   # (tk, D) bf16
        # Contract last dims directly (no k.T / XLU transpose).
        s = jax.lax.dot_general(q, k, (((1,), (1,)), ((), ())),
                                preferred_element_type=jnp.float32) * scale
        row = qi * tq + jax.lax.broadcasted_iota(jnp.int32, (tq, tk), 0)
        col = ki * tk + jax.lax.broadcasted_iota(jnp.int32, (tq, tk), 1)
        s = jnp.where(col <= row, s, -1e30)            # causal mask (f32-safe)
        m_new = jnp.maximum(m_sc[...], jnp.max(s, axis=-1, keepdims=True))
        alpha = jnp.exp(m_sc[...] - m_new)
        p = jnp.exp(s - m_new)
        l_sc[...] = alpha * l_sc[...] + jnp.sum(p, axis=-1, keepdims=True)
        acc_sc[...] = alpha * acc_sc[...] + jnp.dot(
            p.astype(v.dtype), v, preferred_element_type=jnp.float32)
        m_sc[...] = m_new

    @pl.when(ki == pl.num_programs(2) - 1)
    def _finalize():
        o_ref[0] = (acc_sc[...] *
                    pl.reciprocal(l_sc[...], approx=True)).astype(o_ref.dtype)


def flash_causal_attention(q, k, v):
    """q, k, v: (B*nH, S, D) bf16 -> (B*nH, S, D) bf16."""
    BH, S, D = q.shape
    t = 128 if S % 128 == 0 else S          # tq == tk keeps every row non-empty
    tq = tk = t
    scale = 1.0 / math.sqrt(D)
    return pl.pallas_call(
        functools.partial(_flash_attn_kernel, scale=scale, tq=tq, tk=tk),
        out_shape=jax.ShapeDtypeStruct((BH, S, D), q.dtype),
        grid=(BH, S // tq, S // tk),
        in_specs=[pl.BlockSpec((1, tq, D), lambda b, i, j: (b, i, 0)),
                  pl.BlockSpec((1, tk, D), lambda b, i, j: (b, j, 0)),
                  pl.BlockSpec((1, tk, D), lambda b, i, j: (b, j, 0))],
        out_specs=pl.BlockSpec((1, tq, D), lambda b, i, j: (b, i, 0)),
        scratch_shapes=[pltpu.VMEM((tq, 1), jnp.float32),
                        pltpu.VMEM((tq, 1), jnp.float32),
                        pltpu.VMEM((tq, D), jnp.float32)],
        compiler_params=_cparams(("parallel", "parallel", "arbitrary")),
    )(q, k, v)


# ------------------------------- JAX glue ----------------------------------

def apply_rope(q, k, theta=10000.0):
    """Rotary position embedding.  q, k: (B*nH, S, D)."""
    _, S, D = q.shape
    inv_freq = 1.0 / (theta ** (jnp.arange(0, D, 2, dtype=jnp.float32) / D))
    pos = jnp.arange(S, dtype=jnp.float32)
    freqs = pos[:, None] * inv_freq[None, :]              # (S, D/2)
    emb = jnp.concatenate([freqs, freqs], axis=-1)        # (S, D)
    cos = jnp.cos(emb)[None]                              # (1, S, D)
    sin = jnp.sin(emb)[None]

    def rotate_half(x):
        x1, x2 = x[..., : D // 2], x[..., D // 2:]
        return jnp.concatenate([-x2, x1], axis=-1)

    qf, kf = q.astype(jnp.float32), k.astype(jnp.float32)
    q_out = (qf * cos + rotate_half(qf) * sin).astype(q.dtype)
    k_out = (kf * cos + rotate_half(kf) * sin).astype(k.dtype)
    return q_out, k_out


def block_output_wrapper_forward(x, p, num_heads):
    """Reproduces BlockOutputWrapper.forward (no interventions set)."""
    B, S, H = x.shape
    M = B * S
    D = H // num_heads
    V = p["w_unembed"].shape[1]
    I = p["w_gate"].shape[1]
    xf = x.reshape(M, H).astype(jnp.bfloat16)

    # ---- self attention: fused RMSNorm + concatenated QKV projection ----
    qkv = rms_matmul(xf, p["input_ln_w"], p["w_qkv"])      # (M, 3H) bf16

    def split_heads(t):
        return (t.reshape(B, S, num_heads, D)
                 .transpose(0, 2, 1, 3)
                 .reshape(B * num_heads, S, D))
    # TODO(synk): these transposes could be removed with per-head BlockSpec
    # windows when head_dim is a multiple of 128 (lane-dense); at small D the
    # (8,128) block-shape rule forces the 3-D layout.
    q = split_heads(qkv[:, :H])
    k = split_heads(qkv[:, H:2 * H])
    v = split_heads(qkv[:, 2 * H:])
    q, k = apply_rope(q, k)
    ctx = flash_causal_attention(q, k, v)                  # (B*nH, S, D)
    ctx = (ctx.reshape(B, num_heads, S, D)
              .transpose(0, 2, 1, 3)
              .reshape(M, H))

    # o_proj with fused residual: attn_out (= AttnWrapper.activations), hidden
    attn_out, hidden = matmul_residual(ctx, p["wo"], xf)

    # ---- MLP: fused post-attn RMSNorm + gate/up + SwiGLU ----
    post_act = rms_swiglu(hidden, p["post_attn_ln_w"],
                          p["w_gate"], p["w_up"])          # MLPWrapper.post_activation
    # down_proj with fused residual: mlp_out, block_out
    mlp_out, block_out = matmul_residual(post_act, p["w_down"], hidden)

    # ---- wrapper outputs ----
    out_normalized = rmsnorm(block_out, p["final_norm_w"])

    # One weight-stationary norm+unembed pass over all four streams:
    # [block_out ; attn_out ; attn_out + residual (== hidden) ; mlp_out]
    stacked = jnp.concatenate([block_out, attn_out, hidden, mlp_out], axis=0)
    logits = rms_matmul(stacked, p["final_norm_w"], p["w_unembed"],
                        out_dtype=jnp.float32)             # (4M, V) f32
    blk_u, attn_u, inter_u, mlp_u = jnp.split(logits, 4, axis=0)

    return {
        "output": block_out.reshape(B, S, H),
        "output_normalized": out_normalized.reshape(B, S, H),
        "block_output_unembedded": blk_u.reshape(B, S, V),
        "attn_mech_output_unembedded": attn_u.reshape(B, S, V),
        "intermediate_res_unembedded": inter_u.reshape(B, S, V),
        "mlp_post_activation": post_act.reshape(B, S, I),
        "mlp_output_unembedded": mlp_u.reshape(B, S, V),
    }


# ----------------------------- parameter init -------------------------------

def init_params(key, H, I, V):
    ks = jax.random.split(key, 8)
    s = 0.05

    def w(k, shape):
        return (s * jax.random.normal(k, shape, jnp.float32)).astype(jnp.bfloat16)

    wq, wk, wv = w(ks[0], (H, H)), w(ks[1], (H, H)), w(ks[2], (H, H))
    return {
        "input_ln_w": jnp.ones((H,), jnp.float32),
        "post_attn_ln_w": jnp.ones((H,), jnp.float32),
        "final_norm_w": jnp.ones((H,), jnp.float32),
        "w_qkv": jnp.concatenate([wq, wk, wv], axis=1),   # (H, 3H) bf16
        "wo": w(ks[3], (H, H)),
        "w_gate": w(ks[4], (H, I)),
        "w_up": w(ks[5], (H, I)),
        "w_down": w(ks[6], (I, H)),
        # lm_head weight is (V, H) in torch; store transposed as (H, V) bf16.
        "w_unembed": w(ks[7], (H, V)),
    }


# TODO(synk): interventions (add_to_last_tensor, attn add_tensor, mlp neuron
# freeze, act_as_identity) and the CUDA device-placement helper are stateful
# side-channels on the torch module, not part of the default forward; they are
# not reproduced here.

if __name__ == "__main__":
    B, S, H, NH, I, V = 2, 8, 32, 4, 64, 128
    key = jax.random.PRNGKey(0)
    kx, kp = jax.random.split(key)
    x = jax.random.normal(kx, (B, S, H), jnp.float32)
    params = init_params(kp, H, I, V)

    fwd = jax.jit(functools.partial(block_output_wrapper_forward, num_heads=NH))
    outs = fwd(x, params)
    for v_ in outs.values():
        jax.block_until_ready(v_)

    assert outs["output"].shape == (B, S, H)
    assert outs["output_normalized"].shape == (B, S, H)
    assert outs["block_output_unembedded"].shape == (B, S, V)
    assert outs["attn_mech_output_unembedded"].shape == (B, S, V)
    assert outs["intermediate_res_unembedded"].shape == (B, S, V)
    assert outs["mlp_post_activation"].shape == (B, S, I)
    assert outs["mlp_output_unembedded"].shape == (B, S, V)
    print("KERNEL_OK")
</pallas_src>

<mosaic_0001>
module attributes {stable_mosaic.version = 11 : i64} {
  func.func @_rms_matmul_kernel(%arg0: i32, %arg1: i32, %arg2: memref<16x32xbf16, #tpu.memory_space<vmem>>, %arg3: memref<1x32xf32, #tpu.memory_space<vmem>>, %arg4: memref<32x96xbf16, #tpu.memory_space<vmem>>, %arg5: memref<16x96xbf16, #tpu.memory_space<vmem>>) attributes {dimension_semantics = [#tpu.dimension_semantics<parallel>, #tpu.dimension_semantics<parallel>], iteration_bounds = array<i64: 1, 1>, scalar_prefetch = 0 : i64, scratch_operands = 0 : i64, tpu.core_type = #tpu.core_type<tc>, window_params = [{transform_indices = @transform_0, window_bounds = array<i64: 16, 32>}, {pipeline_mode = #tpu.pipeline_mode<synchronous>, transform_indices = @transform_1, window_bounds = array<i64: 1, 32>}, {transform_indices = @transform_2, window_bounds = array<i64: 32, 96>}, {transform_indices = @transform_3, window_bounds = array<i64: 16, 96>}]} {
    %c0 = arith.constant 0 : index
    %c0_0 = arith.constant 0 : index
    %0 = vector.load %arg2[%c0, %c0_0] : memref<16x32xbf16, #tpu.memory_space<vmem>>, vector<16x32xbf16>
    %1 = arith.extf %0 : vector<16x32xbf16> to vector<16x32xf32>
    %2 = arith.mulf %1, %1 : vector<16x32xf32>
    %cst = arith.constant dense<0.000000e+00> : vector<16xf32>
    %3 = vector.multi_reduction <add>, %2, %cst [1] : vector<16x32xf32> to vector<16xf32>
    %4 = vector.shape_cast %3 : vector<16xf32> to vector<16x1xf32>
    %cst_1 = arith.constant 3.200000e+01 : f32
    %5 = vector.broadcast %cst_1 : f32 to vector<16x1xf32>
    %6 = arith.divf %4, %5 : vector<16x1xf32>
    %cst_2 = arith.constant 9.99999997E-7 : f32
    %7 = vector.broadcast %cst_2 : f32 to vector<16x1xf32>
    %8 = arith.addf %6, %7 : vector<16x1xf32>
    %9 = math.rsqrt %8 : vector<16x1xf32>
    %10 = vector.broadcast %9 : vector<16x1xf32> to vector<16x32xf32>
    %11 = arith.mulf %1, %10 : vector<16x32xf32>
    %c0_3 = arith.constant 0 : index
    %c0_4 = arith.constant 0 : index
    %12 = vector.load %arg3[%c0_3, %c0_4] : memref<1x32xf32, #tpu.memory_space<vmem>>, vector<1x32xf32>
    %13 = vector.broadcast %12 : vector<1x32xf32> to vector<16x32xf32>
    %14 = arith.mulf %11, %13 : vector<16x32xf32>
    %15 = arith.truncf %14 : vector<16x32xf32> to vector<16x32xbf16>
    %c0_5 = arith.constant 0 : index
    %c0_6 = arith.constant 0 : index
    %16 = vector.load %arg4[%c0_5, %c0_6] : memref<32x96xbf16, #tpu.memory_space<vmem>>, vector<32x96xbf16>
    %cst_7 = arith.constant dense<0.000000e+00> : vector<16x96xf32>
    %17 = tpu.matmul %15, %16, %cst_7 {dimension_numbers = #tpu.dot_dimension_numbers<[1], [0], [0], [1], [0, 0, 1, 1], [], []>} : vector<16x32xbf16>, vector<32x96xbf16>, vector<16x96xf32> -> vector<16x96xf32>
    %18 = arith.truncf %17 : vector<16x96xf32> to vector<16x96xbf16>
    %c0_8 = arith.constant 0 : index
    %c0_9 = arith.constant 0 : index
    %19 = vector.load %arg5[%c0_8, %c0_9] : memref<16x96xbf16, #tpu.memory_space<vmem>>, vector<16x96xbf16>
    tpu.vector_store %arg5[%c0_8, %c0_9], %18 {strides = array<i32>} : memref<16x96xbf16, #tpu.memory_space<vmem>>, vector<16x96xbf16>,
    return
  }
  func.func @transform_0(%arg0: i32, %arg1: i32) -> (i32, i32) {
    %c0_i32 = arith.constant 0 : i32
    %c0_i32_0 = arith.constant 0 : i32
    return %arg0, %c0_i32 : i32, i32
  }
  func.func @transform_1(%arg0: i32, %arg1: i32) -> (i32, i32) {
    %c0_i32 = arith.constant 0 : i32
    %c0_i32_0 = arith.constant 0 : i32
    %c0_i32_1 = arith.constant 0 : i32
    return %c0_i32, %c0_i32_0 : i32, i32
  }
  func.func @transform_2(%arg0: i32, %arg1: i32) -> (i32, i32) {
    %c0_i32 = arith.constant 0 : i32
    %c0_i32_0 = arith.constant 0 : i32
    return %c0_i32, %arg1 : i32, i32
  }
  func.func @transform_3(%arg0: i32, %arg1: i32) -> (i32, i32) {
    %c0_i32 = arith.constant 0 : i32
    return %arg0, %arg1 : i32, i32
  }
}

module attributes {stable_mosaic.version = 11 : i64} {
  func.func @_rms_swiglu_kernel(%arg0: i32, %arg1: i32, %arg2: memref<16x32xbf16, #tpu.memory_space<vmem>>, %arg3: memref<1x32xf32, #tpu.memory_space<vmem>>, %arg4: memref<32x64xbf16, #tpu.memory_space<vmem>>, %arg5: memref<32x64xbf16, #tpu.memory_space<vmem>>, %arg6: memref<16x64xbf16, #tpu.memory_space<vmem>>) attributes {dimension_semantics = [#tpu.dimension_semantics<parallel>, #tpu.dimension_semantics<parallel>], iteration_bounds = array<i64: 1, 1>, scalar_prefetch = 0 : i64, scratch_operands = 0 : i64, tpu.core_type = #tpu.core_type<tc>, window_params = [{transform_indices = @transform_0, window_bounds = array<i64: 16, 32>}, {pipeline_mode = #tpu.pipeline_mode<synchronous>, transform_indices = @transform_1, window_bounds = array<i64: 1, 32>}, {transform_indices = @transform_2, window_bounds = array<i64: 32, 64>}, {transform_indices = @transform_3, window_bounds = array<i64: 32, 64>}, {transform_indices = @transform_4, window_bounds = array<i64: 16, 64>}]} {
    %c0 = arith.constant 0 : index
    %c0_0 = arith.constant 0 : index
    %0 = vector.load %arg2[%c0, %c0_0] : memref<16x32xbf16, #tpu.memory_space<vmem>>, vector<16x32xbf16>
    %1 = arith.extf %0 : vector<16x32xbf16> to vector<16x32xf32>
    %2 = arith.mulf %1, %1 : vector<16x32xf32>
    %cst = arith.constant dense<0.000000e+00> : vector<16xf32>
    %3 = vector.multi_reduction <add>, %2, %cst [1] : vector<16x32xf32> to vector<16xf32>
    %4 = vector.shape_cast %3 : vector<16xf32> to vector<16x1xf32>
    %cst_1 = arith.constant 3.200000e+01 : f32
    %5 = vector.broadcast %cst_1 : f32 to vector<16x1xf32>
    %6 = arith.divf %4, %5 : vector<16x1xf32>
    %cst_2 = arith.constant 9.99999997E-7 : f32
    %7 = vector.broadcast %cst_2 : f32 to vector<16x1xf32>
    %8 = arith.addf %6, %7 : vector<16x1xf32>
    %9 = math.rsqrt %8 : vector<16x1xf32>
    %10 = vector.broadcast %9 : vector<16x1xf32> to vector<16x32xf32>
    %11 = arith.mulf %1, %10 : vector<16x32xf32>
    %c0_3 = arith.constant 0 : index
    %c0_4 = arith.constant 0 : index
    %12 = vector.load %arg3[%c0_3, %c0_4] : memref<1x32xf32, #tpu.memory_space<vmem>>, vector<1x32xf32>
    %13 = vector.broadcast %12 : vector<1x32xf32> to vector<16x32xf32>
    %14 = arith.mulf %11, %13 : vector<16x32xf32>
    %15 = arith.truncf %14 : vector<16x32xf32> to vector<16x32xbf16>
    %c0_5 = arith.constant 0 : index
    %c0_6 = arith.constant 0 : index
    %16 = vector.load %arg4[%c0_5, %c0_6] : memref<32x64xbf16, #tpu.memory_space<vmem>>, vector<32x64xbf16>
    %cst_7 = arith.constant dense<0.000000e+00> : vector<16x64xf32>
    %17 = tpu.matmul %15, %16, %cst_7 {dimension_numbers = #tpu.dot_dimension_numbers<[1], [0], [0], [1], [0, 0, 1, 1], [], []>} : vector<16x32xbf16>, vector<32x64xbf16>, vector<16x64xf32> -> vector<16x64xf32>
    %c0_8 = arith.constant 0 : index
    %c0_9 = arith.constant 0 : index
    %18 = vector.load %arg5[%c0_8, %c0_9] : memref<32x64xbf16, #tpu.memory_space<vmem>>, vector<32x64xbf16>
    %cst_10 = arith.constant dense<0.000000e+00> : vector<16x64xf32>
    %19 = tpu.matmul %15, %18, %cst_10 {dimension_numbers = #tpu.dot_dimension_numbers<[1], [0], [0], [1], [0, 0, 1, 1], [], []>} : vector<16x32xbf16>, vector<32x64xbf16>, vector<16x64xf32> -> vector<16x64xf32>
    %20 = arith.negf %17 : vector<16x64xf32>
    %21 = math.exp %20 : vector<16x64xf32>
    %cst_11 = arith.constant 1.000000e+00 : f32
    %22 = vector.broadcast %cst_11 : f32 to vector<16x64xf32>
    %23 = arith.addf %22, %21 : vector<16x64xf32>
    %24 = arith.divf %22, %23 : vector<16x64xf32>
    %25 = arith.mulf %17, %24 : vector<16x64xf32>
    %26 = arith.mulf %25, %19 : vector<16x64xf32>
    %27 = arith.truncf %26 : vector<16x64xf32> to vector<16x64xbf16>
    %c0_12 = arith.constant 0 : index
    %c0_13 = arith.constant 0 : index
    %28 = vector.load %arg6[%c0_12, %c0_13] : memref<16x64xbf16, #tpu.memory_space<vmem>>, vector<16x64xbf16>
    tpu.vector_store %arg6[%c0_12, %c0_13], %27 {strides = array<i32>} : memref<16x64xbf16, #tpu.memory_space<vmem>>, vector<16x64xbf16>,
    return
  }
  func.func @transform_0(%arg0: i32, %arg1: i32) -> (i32, i32) {
    %c0_i32 = arith.constant 0 : i32
    %c0_i32_0 = arith.constant 0 : i32
    return %arg0, %c0_i32 : i32, i32
  }
  func.func @transform_1(%arg0: i32, %arg1: i32) -> (i32, i32) {
    %c0_i32 = arith.constant 0 : i32
    %c0_i32_0 = arith.constant 0 : i32
    %c0_i32_1 = arith.constant 0 : i32
    return %c0_i32, %c0_i32_0 : i32, i32
  }
  func.func @transform_2(%arg0: i32, %arg1: i32) -> (i32, i32) {
    %c0_i32 = arith.constant 0 : i32
    %c0_i32_0 = arith.constant 0 : i32
    return %c0_i32, %arg1 : i32, i32
  }
  func.func @transform_3(%arg0: i32, %arg1: i32) -> (i32, i32) {
    %c0_i32 = arith.constant 0 : i32
    %c0_i32_0 = arith.constant 0 : i32
    return %c0_i32, %arg1 : i32, i32
  }
  func.func @transform_4(%arg0: i32, %arg1: i32) -> (i32, i32) {
    %c0_i32 = arith.constant 0 : i32
    return %arg0, %arg1 : i32, i32
  }
}

module attributes {stable_mosaic.version = 11 : i64} {
  func.func @_flash_attn_kernel(%arg0: i32, %arg1: i32, %arg2: i32, %arg3: memref<1x8x8xbf16, #tpu.memory_space<vmem>>, %arg4: memref<1x8x8xbf16, #tpu.memory_space<vmem>>, %arg5: memref<1x8x8xbf16, #tpu.memory_space<vmem>>, %arg6: memref<1x8x8xbf16, #tpu.memory_space<vmem>>, %arg7: memref<8x1xf32, #tpu.memory_space<vmem>>, %arg8: memref<8x1xf32, #tpu.memory_space<vmem>>, %arg9: memref<8x8xf32, #tpu.memory_space<vmem>>) attributes {dimension_semantics = [#tpu.dimension_semantics<parallel>, #tpu.dimension_semantics<parallel>, #tpu.dimension_semantics<arbitrary>], iteration_bounds = array<i64: 8, 1, 1>, scalar_prefetch = 0 : i64, scratch_operands = 3 : i64, tpu.core_type = #tpu.core_type<tc>, window_params = [{transform_indices = @transform_0, window_bounds = array<i64: 1, 8, 8>}, {transform_indices = @transform_1, window_bounds = array<i64: 1, 8, 8>}, {transform_indices = @transform_2, window_bounds = array<i64: 1, 8, 8>}, {transform_indices = @transform_3, window_bounds = array<i64: 1, 8, 8>}]} {
    %c0_i32 = arith.constant 0 : i32
    %0 = arith.cmpi eq, %arg2, %c0_i32 : i32
    %1 = arith.extui %0 : i1 to i32
    %c0_i32_0 = arith.constant 0 : i32
    %2 = arith.cmpi ne, %1, %c0_i32_0 : i32
    scf.if %2 {
      %cst = arith.constant 0xFF800000 : f32
      %12 = vector.broadcast %cst : f32 to vector<8x1xf32>
      %c0 = arith.constant 0 : index
      %c0_5 = arith.constant 0 : index
      %13 = vector.load %arg7[%c0, %c0_5] : memref<8x1xf32, #tpu.memory_space<vmem>>, vector<8x1xf32>
      tpu.vector_store %arg7[%c0, %c0_5], %12 {strides = array<i32>} : memref<8x1xf32, #tpu.memory_space<vmem>>, vector<8x1xf32>,
      %cst_6 = arith.constant 0.000000e+00 : f32
      %14 = vector.broadcast %cst_6 : f32 to vector<8x1xf32>
      %c0_7 = arith.constant 0 : index
      %c0_8 = arith.constant 0 : index
      %15 = vector.load %arg8[%c0_7, %c0_8] : memref<8x1xf32, #tpu.memory_space<vmem>>, vector<8x1xf32>
      tpu.vector_store %arg8[%c0_7, %c0_8], %14 {strides = array<i32>} : memref<8x1xf32, #tpu.memory_space<vmem>>, vector<8x1xf32>,
      %cst_9 = arith.constant 0.000000e+00 : f32
      %16 = vector.broadcast %cst_9 : f32 to vector<8x8xf32>
      %c0_10 = arith.constant 0 : index
      %c0_11 = arith.constant 0 : index
      %17 = vector.load %arg9[%c0_10, %c0_11] : memref<8x8xf32, #tpu.memory_space<vmem>>, vector<8x8xf32>
      tpu.vector_store %arg9[%c0_10, %c0_11], %16 {strides = array<i32>} : memref<8x8xf32, #tpu.memory_space<vmem>>, vector<8x8xf32>,
    } else {
    }
    %c8_i32 = arith.constant 8 : i32
    %3 = arith.muli %arg2, %c8_i32 : i32
    %c1_i32 = arith.constant 1 : i32
    %4 = arith.addi %arg1, %c1_i32 : i32
    %c8_i32_1 = arith.constant 8 : i32
    %5 = arith.muli %4, %c8_i32_1 : i32
    %6 = arith.cmpi slt, %3, %5 : i32
    %7 = arith.extui %6 : i1 to i32
    %c0_i32_2 = arith.constant 0 : i32
    %8 = arith.cmpi ne, %7, %c0_i32_2 : i32
    scf.if %8 {
      %c0 = arith.constant 0 : index
      %c0_5 = arith.constant 0 : index
      %c0_6 = arith.constant 0 : index
      %12 = vector.load %arg3[%c0, %c0_5, %c0_6] : memref<1x8x8xbf16, #tpu.memory_space<vmem>>, vector<1x8x8xbf16>
      %13 = vector.shape_cast %12 : vector<1x8x8xbf16> to vector<8x8xbf16>
      %c0_7 = arith.constant 0 : index
      %c0_8 = arith.constant 0 : index
      %c0_9 = arith.constant 0 : index
      %14 = vector.load %arg4[%c0_7, %c0_8, %c0_9] : memref<1x8x8xbf16, #tpu.memory_space<vmem>>, vector<1x8x8xbf16>
      %15 = vector.shape_cast %14 : vector<1x8x8xbf16> to vector<8x8xbf16>
      %c0_10 = arith.constant 0 : index
      %c0_11 = arith.constant 0 : index
      %c0_12 = arith.constant 0 : index
      %16 = vector.load %arg5[%c0_10, %c0_11, %c0_12] : memref<1x8x8xbf16, #tpu.memory_space<vmem>>, vector<1x8x8xbf16>
      %17 = vector.shape_cast %16 : vector<1x8x8xbf16> to vector<8x8xbf16>
      %cst = arith.constant dense<0.000000e+00> : vector<8x8xf32>
      %18 = tpu.matmul %13, %15, %cst {dimension_numbers = #tpu.dot_dimension_numbers<[1], [1], [0], [0], [0, 0, 1, 0], [], []>} : vector<8x8xbf16>, vector<8x8xbf16>, vector<8x8xf32> -> vector<8x8xf32>
      %cst_13 = arith.constant 0.353553385 : f32
      %19 = vector.broadcast %cst_13 : f32 to vector<8x8xf32>
      %20 = arith.mulf %18, %19 : vector<8x8xf32>
      %c8_i32_14 = arith.constant 8 : i32
      %21 = arith.muli %arg1, %c8_i32_14 : i32
      %22 = tpu.iota {dimensions = array<i32: 0>} : vector<8x8xi32>
      %23 = vector.broadcast %21 : i32 to vector<8x8xi32>
      %24 = arith.addi %23, %22 : vector<8x8xi32>
      %c8_i32_15 = arith.constant 8 : i32
      %25 = arith.muli %arg2, %c8_i32_15 : i32
      %26 = tpu.iota {dimensions = array<i32: 1>} : vector<8x8xi32>
      %27 = vector.broadcast %25 : i32 to vector<8x8xi32>
      %28 = arith.addi %27, %26 : vector<8x8xi32>
      %29 = arith.cmpi sle, %28, %24 : vector<8x8xi32>
      %cst_16 = arith.constant -1.000000e+30 : f32
      %30 = vector.broadcast %cst_16 : f32 to vector<8x8xf32>
      %31 = arith.select %29, %20, %30 : vector<8x8xi1>, vector<8x8xf32>
      %c0_17 = arith.constant 0 : index
      %c0_18 = arith.constant 0 : index
      %32 = vector.load %arg7[%c0_17, %c0_18] : memref<8x1xf32, #tpu.memory_space<vmem>>, vector<8x1xf32>
      %cst_19 = arith.constant dense<0xFF800000> : vector<8xf32>
      %33 = vector.multi_reduction <maximumf>, %31, %cst_19 [1] : vector<8x8xf32> to vector<8xf32>
      %34 = vector.shape_cast %33 : vector<8xf32> to vector<8x1xf32>
      %35 = arith.maximumf %32, %34 : vector<8x1xf32>
      %c0_20 = arith.constant 0 : index
      %c0_21 = arith.constant 0 : index
      %36 = vector.load %arg7[%c0_20, %c0_21] : memref<8x1xf32, #tpu.memory_space<vmem>>, vector<8x1xf32>
      %37 = arith.subf %36, %35 : vector<8x1xf32>
      %38 = math.exp %37 : vector<8x1xf32>
      %39 = vector.broadcast %35 : vector<8x1xf32> to vector<8x8xf32>
      %40 = arith.subf %31, %39 : vector<8x8xf32>
      %41 = math.exp %40 : vector<8x8xf32>
      %c0_22 = arith.constant 0 : index
      %c0_23 = arith.constant 0 : index
      %42 = vector.load %arg8[%c0_22, %c0_23] : memref<8x1xf32, #tpu.memory_space<vmem>>, vector<8x1xf32>
      %43 = arith.mulf %38, %42 : vector<8x1xf32>
      %cst_24 = arith.constant dense<0.000000e+00> : vector<8xf32>
      %44 = vector.multi_reduction <add>, %41, %cst_24 [1] : vector<8x8xf32> to vector<8xf32>
      %45 = vector.shape_cast %44 : vector<8xf32> to vector<8x1xf32>
      %46 = arith.addf %43, %45 : vector<8x1xf32>
      %c0_25 = arith.constant 0 : index
      %c0_26 = arith.constant 0 : index
      %47 = vector.load %arg8[%c0_25, %c0_26] : memref<8x1xf32, #tpu.memory_space<vmem>>, vector<8x1xf32>
      tpu.vector_store %arg8[%c0_25, %c0_26], %46 {strides = array<i32>} : memref<8x1xf32, #tpu.memory_space<vmem>>, vector<8x1xf32>,
      %c0_27 = arith.constant 0 : index
      %c0_28 = arith.constant 0 : index
      %48 = vector.load %arg9[%c0_27, %c0_28] : memref<8x8xf32, #tpu.memory_space<vmem>>, vector<8x8xf32>
      %49 = vector.broadcast %38 : vector<8x1xf32> to vector<8x8xf32>
      %50 = arith.mulf %49, %48 : vector<8x8xf32>
      %51 = arith.truncf %41 : vector<8x8xf32> to vector<8x8xbf16>
      %cst_29 = arith.constant dense<0.000000e+00> : vector<8x8xf32>
      %52 = tpu.matmul %51, %17, %cst_29 {dimension_numbers = #tpu.dot_dimension_numbers<[1], [0], [0], [1], [0, 0, 1, 1], [], []>} : vector<8x8xbf16>, vector<8x8xbf16>, vector<8x8xf32> -> vector<8x8xf32>
      %53 = arith.addf %50, %52 : vector<8x8xf32>
      %c0_30 = arith.constant 0 : index
      %c0_31 = arith.constant 0 : index
      %54 = vector.load %arg9[%c0_30, %c0_31] : memref<8x8xf32, #tpu.memory_space<vmem>>, vector<8x8xf32>
      tpu.vector_store %arg9[%c0_30, %c0_31], %53 {strides = array<i32>} : memref<8x8xf32, #tpu.memory_space<vmem>>, vector<8x8xf32>,
      %c0_32 = arith.constant 0 : index
      %c0_33 = arith.constant 0 : index
      %55 = vector.load %arg7[%c0_32, %c0_33] : memref<8x1xf32, #tpu.memory_space<vmem>>, vector<8x1xf32>
      tpu.vector_store %arg7[%c0_32, %c0_33], %35 {strides = array<i32>} : memref<8x1xf32, #tpu.memory_space<vmem>>, vector<8x1xf32>,
    } else {
    }
    %c0_i32_3 = arith.constant 0 : i32
    %9 = arith.cmpi eq, %arg2, %c0_i32_3 : i32
    %10 = arith.extui %9 : i1 to i32
    %c0_i32_4 = arith.constant 0 : i32
    %11 = arith.cmpi ne, %10, %c0_i32_4 : i32
    scf.if %11 {
      %c0 = arith.constant 0 : index
      %c0_5 = arith.constant 0 : index
      %12 = vector.load %arg9[%c0, %c0_5] : memref<8x8xf32, #tpu.memory_space<vmem>>, vector<8x8xf32>
      %c0_6 = arith.constant 0 : index
      %c0_7 = arith.constant 0 : index
      %13 = vector.load %arg8[%c0_6, %c0_7] : memref<8x1xf32, #tpu.memory_space<vmem>>, vector<8x1xf32>
      %14 = tpu.reciprocal %13 {approx = true} : vector<8x1xf32> -> vector<8x1xf32>
      %15 = vector.broadcast %14 : vector<8x1xf32> to vector<8x8xf32>
      %16 = arith.mulf %12, %15 : vector<8x8xf32>
      %17 = arith.truncf %16 : vector<8x8xf32> to vector<8x8xbf16>
      %c0_8 = arith.constant 0 : index
      %c0_9 = arith.constant 0 : index
      %c0_10 = arith.constant 0 : index
      %18 = vector.load %arg6[%c0_8, %c0_9, %c0_10] : memref<1x8x8xbf16, #tpu.memory_space<vmem>>, vector<1x8x8xbf16>
      %19 = vector.shape_cast %18 : vector<1x8x8xbf16> to vector<8x8xbf16>
      %20 = vector.shape_cast %17 : vector<8x8xbf16> to vector<1x8x8xbf16>
      tpu.vector_store %arg6[%c0_8, %c0_9, %c0_10], %20 {strides = array<i32>} : memref<1x8x8xbf16, #tpu.memory_space<vmem>>, vector<1x8x8xbf16>,
    } else {
    }
    return
  }
  func.func @transform_0(%arg0: i32, %arg1: i32, %arg2: i32) -> (i32, i32, i32) {
    %c0_i32 = arith.constant 0 : i32
    %c0_i32_0 = arith.constant 0 : i32
    return %arg0, %arg1, %c0_i32 : i32, i32, i32
  }
  func.func @transform_1(%arg0: i32, %arg1: i32, %arg2: i32) -> (i32, i32, i32) {
    %c0_i32 = arith.constant 0 : i32
    %c0_i32_0 = arith.constant 0 : i32
    return %arg0, %arg2, %c0_i32 : i32, i32, i32
  }
  func.func @transform_2(%arg0: i32, %arg1: i32, %arg2: i32) -> (i32, i32, i32) {
    %c0_i32 = arith.constant 0 : i32
    %c0_i32_0 = arith.constant 0 : i32
    return %arg0, %arg2, %c0_i32 : i32, i32, i32
  }
  func.func @transform_3(%arg0: i32, %arg1: i32, %arg2: i32) -> (i32, i32, i32) {
    %c0_i32 = arith.constant 0 : i32
    %c0_i32_0 = arith.constant 0 : i32
    return %arg0, %arg1, %c0_i32 : i32, i32, i32
  }
}

module attributes {stable_mosaic.version = 11 : i64} {
  func.func @_matmul_residual_kernel(%arg0: i32, %arg1: i32, %arg2: memref<16x32xbf16, #tpu.memory_space<vmem>>, %arg3: memref<32x32xbf16, #tpu.memory_space<vmem>>, %arg4: memref<16x32xbf16, #tpu.memory_space<vmem>>, %arg5: memref<16x32xbf16, #tpu.memory_space<vmem>>, %arg6: memref<16x32xbf16, #tpu.memory_space<vmem>>) attributes {dimension_semantics = [#tpu.dimension_semantics<parallel>, #tpu.dimension_semantics<parallel>], iteration_bounds = array<i64: 1, 1>, scalar_prefetch = 0 : i64, scratch_operands = 0 : i64, tpu.core_type = #tpu.core_type<tc>, window_params = [{transform_indices = @transform_0, window_bounds = array<i64: 16, 32>}, {transform_indices = @transform_1, window_bounds = array<i64: 32, 32>}, {transform_indices = @transform_2, window_bounds = array<i64: 16, 32>}, {transform_indices = @transform_3, window_bounds = array<i64: 16, 32>}, {transform_indices = @transform_4, window_bounds = array<i64: 16, 32>}]} {
    %c0 = arith.constant 0 : index
    %c0_0 = arith.constant 0 : index
    %0 = vector.load %arg2[%c0, %c0_0] : memref<16x32xbf16, #tpu.memory_space<vmem>>, vector<16x32xbf16>
    %c0_1 = arith.constant 0 : index
    %c0_2 = arith.constant 0 : index
    %1 = vector.load %arg3[%c0_1, %c0_2] : memref<32x32xbf16, #tpu.memory_space<vmem>>, vector<32x32xbf16>
    %cst = arith.constant dense<0.000000e+00> : vector<16x32xf32>
    %2 = tpu.matmul %0, %1, %cst {dimension_numbers = #tpu.dot_dimension_numbers<[1], [0], [0], [1], [0, 0, 1, 1], [], []>} : vector<16x32xbf16>, vector<32x32xbf16>, vector<16x32xf32> -> vector<16x32xf32>
    %3 = arith.truncf %2 : vector<16x32xf32> to vector<16x32xbf16>
    %c0_3 = arith.constant 0 : index
    %c0_4 = arith.constant 0 : index
    %4 = vector.load %arg5[%c0_3, %c0_4] : memref<16x32xbf16, #tpu.memory_space<vmem>>, vector<16x32xbf16>
    tpu.vector_store %arg5[%c0_3, %c0_4], %3 {strides = array<i32>} : memref<16x32xbf16, #tpu.memory_space<vmem>>, vector<16x32xbf16>,
    %c0_5 = arith.constant 0 : index
    %c0_6 = arith.constant 0 : index
    %5 = vector.load %arg4[%c0_5, %c0_6] : memref<16x32xbf16, #tpu.memory_space<vmem>>, vector<16x32xbf16>
    %6 = arith.extf %5 : vector<16x32xbf16> to vector<16x32xf32>
    %7 = arith.addf %2, %6 : vector<16x32xf32>
    %8 = arith.truncf %7 : vector<16x32xf32> to vector<16x32xbf16>
    %c0_7 = arith.constant 0 : index
    %c0_8 = arith.constant 0 : index
    %9 = vector.load %arg6[%c0_7, %c0_8] : memref<16x32xbf16, #tpu.memory_space<vmem>>, vector<16x32xbf16>
    tpu.vector_store %arg6[%c0_7, %c0_8], %8 {strides = array<i32>} : memref<16x32xbf16, #tpu.memory_space<vmem>>, vector<16x32xbf16>,
    return
  }
  func.func @transform_0(%arg0: i32, %arg1: i32) -> (i32, i32) {
    %c0_i32 = arith.constant 0 : i32
    %c0_i32_0 = arith.constant 0 : i32
    return %arg0, %c0_i32 : i32, i32
  }
  func.func @transform_1(%arg0: i32, %arg1: i32) -> (i32, i32) {
    %c0_i32 = arith.constant 0 : i32
    %c0_i32_0 = arith.constant 0 : i32
    return %c0_i32, %arg1 : i32, i32
  }
  func.func @transform_2(%arg0: i32, %arg1: i32) -> (i32, i32) {
    %c0_i32 = arith.constant 0 : i32
    return %arg0, %arg1 : i32, i32
  }
  func.func @transform_3(%arg0: i32, %arg1: i32) -> (i32, i32) {
    %c0_i32 = arith.constant 0 : i32
    return %arg0, %arg1 : i32, i32
  }
  func.func @transform_4(%arg0: i32, %arg1: i32) -> (i32, i32) {
    %c0_i32 = arith.constant 0 : i32
    return %arg0, %arg1 : i32, i32
  }
}

module attributes {stable_mosaic.version = 11 : i64} {
  func.func @_matmul_residual_kernel(%arg0: i32, %arg1: i32, %arg2: memref<16x64xbf16, #tpu.memory_space<vmem>>, %arg3: memref<64x32xbf16, #tpu.memory_space<vmem>>, %arg4: memref<16x32xbf16, #tpu.memory_space<vmem>>, %arg5: memref<16x32xbf16, #tpu.memory_space<vmem>>, %arg6: memref<16x32xbf16, #tpu.memory_space<vmem>>) attributes {dimension_semantics = [#tpu.dimension_semantics<parallel>, #tpu.dimension_semantics<parallel>], iteration_bounds = array<i64: 1, 1>, scalar_prefetch = 0 : i64, scratch_operands = 0 : i64, tpu.core_type = #tpu.core_type<tc>, window_params = [{transform_indices = @transform_0, window_bounds = array<i64: 16, 64>}, {transform_indices = @transform_1, window_bounds = array<i64: 64, 32>}, {transform_indices = @transform_2, window_bounds = array<i64: 16, 32>}, {transform_indices = @transform_3, window_bounds = array<i64: 16, 32>}, {transform_indices = @transform_4, window_bounds = array<i64: 16, 32>}]} {
    %c0 = arith.constant 0 : index
    %c0_0 = arith.constant 0 : index
    %0 = vector.load %arg2[%c0, %c0_0] : memref<16x64xbf16, #tpu.memory_space<vmem>>, vector<16x64xbf16>
    %c0_1 = arith.constant 0 : index
    %c0_2 = arith.constant 0 : index
    %1 = vector.load %arg3[%c0_1, %c0_2] : memref<64x32xbf16, #tpu.memory_space<vmem>>, vector<64x32xbf16>
    %cst = arith.constant dense<0.000000e+00> : vector<16x32xf32>
    %2 = tpu.matmul %0, %1, %cst {dimension_numbers = #tpu.dot_dimension_numbers<[1], [0], [0], [1], [0, 0, 1, 1], [], []>} : vector<16x64xbf16>, vector<64x32xbf16>, vector<16x32xf32> -> vector<16x32xf32>
    %3 = arith.truncf %2 : vector<16x32xf32> to vector<16x32xbf16>
    %c0_3 = arith.constant 0 : index
    %c0_4 = arith.constant 0 : index
    %4 = vector.load %arg5[%c0_3, %c0_4] : memref<16x32xbf16, #tpu.memory_space<vmem>>, vector<16x32xbf16>
    tpu.vector_store %arg5[%c0_3, %c0_4], %3 {strides = array<i32>} : memref<16x32xbf16, #tpu.memory_space<vmem>>, vector<16x32xbf16>,
    %c0_5 = arith.constant 0 : index
    %c0_6 = arith.constant 0 : index
    %5 = vector.load %arg4[%c0_5, %c0_6] : memref<16x32xbf16, #tpu.memory_space<vmem>>, vector<16x32xbf16>
    %6 = arith.extf %5 : vector<16x32xbf16> to vector<16x32xf32>
    %7 = arith.addf %2, %6 : vector<16x32xf32>
    %8 = arith.truncf %7 : vector<16x32xf32> to vector<16x32xbf16>
    %c0_7 = arith.constant 0 : index
    %c0_8 = arith.constant 0 : index
    %9 = vector.load %arg6[%c0_7, %c0_8] : memref<16x32xbf16, #tpu.memory_space<vmem>>, vector<16x32xbf16>
    tpu.vector_store %arg6[%c0_7, %c0_8], %8 {strides = array<i32>} : memref<16x32xbf16, #tpu.memory_space<vmem>>, vector<16x32xbf16>,
    return
  }
  func.func @transform_0(%arg0: i32, %arg1: i32) -> (i32, i32) {
    %c0_i32 = arith.constant 0 : i32
    %c0_i32_0 = arith.constant 0 : i32
    return %arg0, %c0_i32 : i32, i32
  }
  func.func @transform_1(%arg0: i32, %arg1: i32) -> (i32, i32) {
    %c0_i32 = arith.constant 0 : i32
    %c0_i32_0 = arith.constant 0 : i32
    return %c0_i32, %arg1 : i32, i32
  }
  func.func @transform_2(%arg0: i32, %arg1: i32) -> (i32, i32) {
    %c0_i32 = arith.constant 0 : i32
    return %arg0, %arg1 : i32, i32
  }
  func.func @transform_3(%arg0: i32, %arg1: i32) -> (i32, i32) {
    %c0_i32 = arith.constant 0 : i32
    return %arg0, %arg1 : i32, i32
  }
  func.func @transform_4(%arg0: i32, %arg1: i32) -> (i32, i32) {
    %c0_i32 = arith.constant 0 : i32
    return %arg0, %arg1 : i32, i32
  }
}

module attributes {stable_mosaic.version = 11 : i64} {
  func.func @_rms_matmul_kernel(%arg0: i32, %arg1: i32, %arg2: memref<64x32xbf16, #tpu.memory_space<vmem>>, %arg3: memref<1x32xf32, #tpu.memory_space<vmem>>, %arg4: memref<32x128xbf16, #tpu.memory_space<vmem>>, %arg5: memref<64x128xf32, #tpu.memory_space<vmem>>) attributes {dimension_semantics = [#tpu.dimension_semantics<parallel>, #tpu.dimension_semantics<parallel>], iteration_bounds = array<i64: 1, 1>, scalar_prefetch = 0 : i64, scratch_operands = 0 : i64, tpu.core_type = #tpu.core_type<tc>, window_params = [{transform_indices = @transform_0, window_bounds = array<i64: 64, 32>}, {pipeline_mode = #tpu.pipeline_mode<synchronous>, transform_indices = @transform_1, window_bounds = array<i64: 1, 32>}, {transform_indices = @transform_2, window_bounds = array<i64: 32, 128>}, {transform_indices = @transform_3, window_bounds = array<i64: 64, 128>}]} {
    %c0 = arith.constant 0 : index
    %c0_0 = arith.constant 0 : index
    %0 = vector.load %arg2[%c0, %c0_0] : memref<64x32xbf16, #tpu.memory_space<vmem>>, vector<64x32xbf16>
    %1 = arith.extf %0 : vector<64x32xbf16> to vector<64x32xf32>
    %2 = arith.mulf %1, %1 : vector<64x32xf32>
    %cst = arith.constant dense<0.000000e+00> : vector<64xf32>
    %3 = vector.multi_reduction <add>, %2, %cst [1] : vector<64x32xf32> to vector<64xf32>
    %4 = vector.shape_cast %3 : vector<64xf32> to vector<64x1xf32>
    %cst_1 = arith.constant 3.200000e+01 : f32
    %5 = vector.broadcast %cst_1 : f32 to vector<64x1xf32>
    %6 = arith.divf %4, %5 : vector<64x1xf32>
    %cst_2 = arith.constant 9.99999997E-7 : f32
    %7 = vector.broadcast %cst_2 : f32 to vector<64x1xf32>
    %8 = arith.addf %6, %7 : vector<64x1xf32>
    %9 = math.rsqrt %8 : vector<64x1xf32>
    %10 = vector.broadcast %9 : vector<64x1xf32> to vector<64x32xf32>
    %11 = arith.mulf %1, %10 : vector<64x32xf32>
    %c0_3 = arith.constant 0 : index
    %c0_4 = arith.constant 0 : index
    %12 = vector.load %arg3[%c0_3, %c0_4] : memref<1x32xf32, #tpu.memory_space<vmem>>, vector<1x32xf32>
    %13 = vector.broadcast %12 : vector<1x32xf32> to vector<64x32xf32>
    %14 = arith.mulf %11, %13 : vector<64x32xf32>
    %15 = arith.truncf %14 : vector<64x32xf32> to vector<64x32xbf16>
    %c0_5 = arith.constant 0 : index
    %c0_6 = arith.constant 0 : index
    %16 = vector.load %arg4[%c0_5, %c0_6] : memref<32x128xbf16, #tpu.memory_space<vmem>>, vector<32x128xbf16>
    %cst_7 = arith.constant dense<0.000000e+00> : vector<64x128xf32>
    %17 = tpu.matmul %15, %16, %cst_7 {dimension_numbers = #tpu.dot_dimension_numbers<[1], [0], [0], [1], [0, 0, 1, 1], [], []>} : vector<64x32xbf16>, vector<32x128xbf16>, vector<64x128xf32> -> vector<64x128xf32>
    %c0_8 = arith.constant 0 : index
    %c0_9 = arith.constant 0 : index
    %18 = vector.load %arg5[%c0_8, %c0_9] : memref<64x128xf32, #tpu.memory_space<vmem>>, vector<64x128xf32>
    tpu.vector_store %arg5[%c0_8, %c0_9], %17 {strides = array<i32>} : memref<64x128xf32, #tpu.memory_space<vmem>>, vector<64x128xf32>,
    return
  }
  func.func @transform_0(%arg0: i32, %arg1: i32) -> (i32, i32) {
    %c0_i32 = arith.constant 0 : i32
    %c0_i32_0 = arith.constant 0 : i32
    return %arg0, %c0_i32 : i32, i32
  }
  func.func @transform_1(%arg0: i32, %arg1: i32) -> (i32, i32) {
    %c0_i32 = arith.constant 0 : i32
    %c0_i32_0 = arith.constant 0 : i32
    %c0_i32_1 = arith.constant 0 : i32
    return %c0_i32, %c0_i32_0 : i32, i32
  }
  func.func @transform_2(%arg0: i32, %arg1: i32) -> (i32, i32) {
    %c0_i32 = arith.constant 0 : i32
    %c0_i32_0 = arith.constant 0 : i32
    return %c0_i32, %arg1 : i32, i32
  }
  func.func @transform_3(%arg0: i32, %arg1: i32) -> (i32, i32) {
    %c0_i32 = arith.constant 0 : i32
    return %arg0, %arg1 : i32, i32
  }
}

module attributes {stable_mosaic.version = 11 : i64} {
  func.func @_rmsnorm_kernel(%arg0: i32, %arg1: memref<16x32xbf16, #tpu.memory_space<vmem>>, %arg2: memref<1x32xf32, #tpu.memory_space<vmem>>, %arg3: memref<16x32xf32, #tpu.memory_space<vmem>>) attributes {dimension_semantics = [#tpu.dimension_semantics<parallel>], iteration_bounds = array<i64: 1>, scalar_prefetch = 0 : i64, scratch_operands = 0 : i64, tpu.core_type = #tpu.core_type<tc>, window_params = [{transform_indices = @transform_0, window_bounds = array<i64: 16, 32>}, {pipeline_mode = #tpu.pipeline_mode<synchronous>, transform_indices = @transform_1, window_bounds = array<i64: 1, 32>}, {transform_indices = @transform_2, window_bounds = array<i64: 16, 32>}]} {
    %c0 = arith.constant 0 : index
    %c0_0 = arith.constant 0 : index
    %0 = vector.load %arg1[%c0, %c0_0] : memref<16x32xbf16, #tpu.memory_space<vmem>>, vector<16x32xbf16>
    %1 = arith.extf %0 : vector<16x32xbf16> to vector<16x32xf32>
    %2 = arith.mulf %1, %1 : vector<16x32xf32>
    %cst = arith.constant dense<0.000000e+00> : vector<16xf32>
    %3 = vector.multi_reduction <add>, %2, %cst [1] : vector<16x32xf32> to vector<16xf32>
    %4 = vector.shape_cast %3 : vector<16xf32> to vector<16x1xf32>
    %cst_1 = arith.constant 3.200000e+01 : f32
    %5 = vector.broadcast %cst_1 : f32 to vector<16x1xf32>
    %6 = arith.divf %4, %5 : vector<16x1xf32>
    %cst_2 = arith.constant 9.99999997E-7 : f32
    %7 = vector.broadcast %cst_2 : f32 to vector<16x1xf32>
    %8 = arith.addf %6, %7 : vector<16x1xf32>
    %9 = math.rsqrt %8 : vector<16x1xf32>
    %10 = vector.broadcast %9 : vector<16x1xf32> to vector<16x32xf32>
    %11 = arith.mulf %1, %10 : vector<16x32xf32>
    %c0_3 = arith.constant 0 : index
    %c0_4 = arith.constant 0 : index
    %12 = vector.load %arg2[%c0_3, %c0_4] : memref<1x32xf32, #tpu.memory_space<vmem>>, vector<1x32xf32>
    %13 = vector.broadcast %12 : vector<1x32xf32> to vector<16x32xf32>
    %14 = arith.mulf %11, %13 : vector<16x32xf32>
    %c0_5 = arith.constant 0 : index
    %c0_6 = arith.constant 0 : index
    %15 = vector.load %arg3[%c0_5, %c0_6] : memref<16x32xf32, #tpu.memory_space<vmem>>, vector<16x32xf32>
    tpu.vector_store %arg3[%c0_5, %c0_6], %14 {strides = array<i32>} : memref<16x32xf32, #tpu.memory_space<vmem>>, vector<16x32xf32>,
    return
  }
  func.func @transform_0(%arg0: i32) -> (i32, i32) {
    %c0_i32 = arith.constant 0 : i32
    %c0_i32_0 = arith.constant 0 : i32
    return %arg0, %c0_i32 : i32, i32
  }
  func.func @transform_1(%arg0: i32) -> (i32, i32) {
    %c0_i32 = arith.constant 0 : i32
    %c0_i32_0 = arith.constant 0 : i32
    %c0_i32_1 = arith.constant 0 : i32
    return %c0_i32, %c0_i32_0 : i32, i32
  }
  func.func @transform_2(%arg0: i32) -> (i32, i32) {
    %c0_i32 = arith.constant 0 : i32
    %c0_i32_0 = arith.constant 0 : i32
    return %arg0, %c0_i32 : i32, i32
  }
}

</mosaic_0001>

<llo_original>
// kernel: block_output_wrapper_forward.7
$region0: #{block_output_wrapper_forward.7}
  #allocation0 [shape = 'u32[]', space=smem, size = 0x4, offset = 0x4, fixed_abs, tag = 'smem constant byte address 0x4 - core index']
  #allocation1 [shape = 'u32[144,128]{1,0:T(1,128)}', space=vmem, size = 0x12000, scoped, tag = 'internal scratch']
  %s0 = inlined_call_operand.vmem [shape: bf16[16,32], index: 0, kind: input, shape index: {}]
  %s1 = inlined_call_operand.vmem [shape: f32[1,32], index: 1, kind: input, shape index: {}]
  %s2 = inlined_call_operand.vmem [shape: bf16[32,96], index: 2, kind: input, shape index: {}]
  %s3 = inlined_call_operand.vmem [shape: bf16[16,96], index: 3, kind: output, shape index: {}]
  %s4 = sld [smem:[#allocation0]]
  $region22: #{block_output_wrapper_forward.7} parent=0
    _
  %s6 = ssub.s32 1, %s4
  %s7 = scalar_select 0, %s6, %s4
  // Predicated region
  $region2: #{block_output_wrapper_forward.7} parent=0 // pred_check
    _
  $region3: #{block_output_wrapper_forward.7} parent=0 // pred_check_branch
    %9 = sbr.rel (0) target = $region5
  $region4: #{block_output_wrapper_forward.7} parent=0 // pred_region
    _
  $region5: #{block_output_wrapper_forward.7} parent=0 // pred_fallthru
    _
  // Predicated region
  $region6: #{block_output_wrapper_forward.7} parent=0 // pred_check
    _
  $region7: #{block_output_wrapper_forward.7} parent=0 // pred_check_branch
    %11 = sbr.rel (0) target = $region9
  $region8: #{block_output_wrapper_forward.7} parent=0 // pred_region
    _
  $region9: #{block_output_wrapper_forward.7} parent=0 // pred_fallthru
    _
  // Predicated region
  $region10: #{block_output_wrapper_forward.7} parent=0 // pred_check
    _
  $region11: #{block_output_wrapper_forward.7} parent=0 // pred_check_branch
    %13 = sbr.rel (0) target = $region13
  $region12: #{block_output_wrapper_forward.7} parent=0 // pred_region
    _
  $region13: #{block_output_wrapper_forward.7} parent=0 // pred_fallthru
    _
  %v15 = vld [vmem:[%s0] sm:$0xf]
  %v16 = vld [vmem:[%s0 + $0x4] sm:$0xf]
  %v17 = vunpack.c.l.bf16 %v15
  %v18 = vunpack.c.l.bf16 %v16
  %v19 = vmul.f32 %v17, %v17
  %v20 = vmul.f32 %v18, %v18
  %vm21 = vcmask 261120
  %v22 = vsel %vm21, %v19, 0.0
  %23 = vadd.xlane.f32.xlu0 %v22
  %v24 = vpop.xlane.xlu0 %23
  %v25 = vsel %vm21, %v20, 0.0
  %26 = vadd.xlane.f32.xlu0 %v25
  %v27 = vpop.xlane.xlu0 %26
  %v28 = vrcp.pop 32.0
  %v29 = vmul.f32 %v24, %v28
  %v30 = vmul.f32 %v27, %v28
  %v31 = vadd.f32 %v29, 1e-06
  %v32 = vadd.f32 %v30, 1e-06
  %v33 = vrsqrt.pop %v31
  %v34 = vrsqrt.pop %v32
  %v35 = vmul.f32 %v17, %v33
  %v36 = vmul.f32 %v18, %v34
  %v37 = vld [vmem:[%s1] sm:$0x1]
  %v39 = vlaneseq
  %v40 = vshrl.u32 %v39, 7
  %v41 = vsub.s32 0, %v40
  %v42 = vrot.slane %v37, %v41
  %v44 = vmul.f32 %v35, %v42
  %v45 = vmul.f32 %v36, %v42
  %v46 = vpack.c.bf16 %v45, %v44
  %v47 = vld [vmem:[%s2] sm:$0xf]
  %v48 = vld [vmem:[%s2 + $0x4] sm:$0xf]
  %v49 = vld [vmem:[%s2 + $0x8] sm:$0xf]
  %v50 = vld [vmem:[%s2 + $0xc] sm:$0xf]
  %v55 = vunpack.c.l.b16 %v47
  %v56 = vunpack.c.l.b16 %v48
  %v57 = vunpack.c.l.b16 %v49
  %v58 = vunpack.c.l.b16 %v50
  %v59 = vpack.c.b16 %v56, %v55
  %v60 = vpack.c.b16 %v58, %v57
  %v64 = vsel %vm21, %v46, 0
  %66 = vmatprep.subr.bf16.mxu0 0
  %67 = vmatpush1.bf16.msra.mxu0 %v59
  %68 = vmatprep.subr.bf16.mxu0 0
  %69 = vmatpush1.bf16.msra.mxu0 %v60
  %70 = vmatprep.subr.bf16.mxu0 0
  %71 = vmatpush1.bf16.msra.mxu0 0
  %72 = vmatprep.subr.bf16.mxu0 0
  %73 = vmatpush1.bf16.msra.mxu0 0
  %74 = vmatprep.subr.bf16.mxu0 0
  %75 = vmatpush1.bf16.msra.mxu0 0
  %76 = vmatprep.subr.bf16.mxu0 0
  %77 = vmatpush1.bf16.msra.mxu0 0
  %78 = vmatprep.subr.bf16.mxu0 0
  %79 = vmatpush1.bf16.msra.mxu0 0
  %80 = vmatprep.subr.bf16.mxu0 0
  %81 = vmatpush1.bf16.msra.mxu0 0
  %82 = vmatprep.subr.bf16.mxu0 0
  %83 = vmatpush1.bf16.msra.mxu0 0
  %84 = vmatprep.subr.bf16.mxu0 0
  %85 = vmatpush1.bf16.msra.mxu0 0
  %86 = vmatprep.subr.bf16.mxu0 0
  %87 = vmatpush1.bf16.msra.mxu0 0
  %88 = vmatprep.subr.bf16.mxu0 0
  %89 = vmatpush1.bf16.msra.mxu0 0
  %90 = vmatprep.subr.bf16.mxu0 0
  %91 = vmatpush1.bf16.msra.mxu0 0
  %92 = vmatprep.subr.bf16.mxu0 0
  %93 = vmatpush1.bf16.msra.mxu0 0
  %94 = vmatprep.subr.bf16.mxu0 0
  %95 = vmatpush1.bf16.msra.mxu0 0
  %96 = vmatprep.subr.bf16.mxu0 0
  %97 = vmatpush1.bf16.msra.mxu0 0
  %98 = vmatprep.mubr.bf16.mxu0 0
  %99 = vmatmul.mubr.bf16.gmra.mrb[0].mxu0 %v64
  %v100 = vpop.f32.mrb[0].mxu0
  %v101 = vadd.f32 0.0, %v100
  %v102 = vpop.f32.mrb[0].mxu0
  %v103 = vpop.f32.mrb[0].mxu0
  %v104 = vadd.f32 0.0, %v103
  %v105 = vpop.f32.mrb[0].mxu0
  %106 = vdwg.mxu0
  %v107 = vpack.c.bf16 %v104, %v101
  %v109 = vunpack.c.l.b16 %v107
  %v110 = vunpack.c.h.b16 %v107
  %v111 = vpack.c.b16 %v109, %v109
  %v112 = vpack.c.b16 %v110, %v110
  %vm115 = vcmask 781312
  %116 = vst.msk [vmem:[%s3] sm:$0xf] %vm115, %v111
  %117 = vst.msk [vmem:[%s3 + $0x4] sm:$0xf] %vm115, %v112
  // Predicated region
  $region14: #{block_output_wrapper_forward.7} parent=0 // pred_check
    _
  $region15: #{block_output_wrapper_forward.7} parent=0 // pred_check_branch
    %119 = sbr.rel (0) target = $region17
  $region16: #{block_output_wrapper_forward.7} parent=0 // pred_region
    _
  $region17: #{block_output_wrapper_forward.7} parent=0 // pred_fallthru
    _
  // Predicated region
  $region18: #{block_output_wrapper_forward.7} parent=0 // pred_check
    _
  $region19: #{block_output_wrapper_forward.7} parent=0 // pred_check_branch
    %121 = sbr.rel (0) target = $region21
  $region20: #{block_output_wrapper_forward.7} parent=0 // pred_region
    _
  $region21: #{block_output_wrapper_forward.7} parent=0 // pred_fallthru
    _

// kernel: block_output_wrapper_forward.10
$region0: #{block_output_wrapper_forward.10}
  #allocation0 [shape = 'u32[]', space=smem, size = 0x4, offset = 0x4, fixed_abs, tag = 'smem constant byte address 0x4 - core index']
  #allocation1 [shape = 'u32[144,128]{1,0:T(1,128)}', space=vmem, size = 0x12000, scoped, tag = 'internal scratch']
  %s0 = inlined_call_operand.vmem [shape: bf16[16,32], index: 0, kind: input, shape index: {}]
  %s1 = inlined_call_operand.vmem [shape: f32[1,32], index: 1, kind: input, shape index: {}]
  %s2 = inlined_call_operand.vmem [shape: bf16[32,64], index: 2, kind: input, shape index: {}]
  %s3 = inlined_call_operand.vmem [shape: bf16[32,64], index: 3, kind: input, shape index: {}]
  %s4 = inlined_call_operand.vmem [shape: bf16[16,64], index: 4, kind: output, shape index: {}]
  %s5 = sld [smem:[#allocation0]]
  $region26: #{block_output_wrapper_forward.10} parent=0
    _
  %s7 = ssub.s32 1, %s5
  %s8 = scalar_select 0, %s7, %s5
  // Predicated region
  $region2: #{block_output_wrapper_forward.10} parent=0 // pred_check
    _
  $region3: #{block_output_wrapper_forward.10} parent=0 // pred_check_branch
    %10 = sbr.rel (0) target = $region5
  $region4: #{block_output_wrapper_forward.10} parent=0 // pred_region
    _
  $region5: #{block_output_wrapper_forward.10} parent=0 // pred_fallthru
    _
  // Predicated region
  $region6: #{block_output_wrapper_forward.10} parent=0 // pred_check
    _
  $region7: #{block_output_wrapper_forward.10} parent=0 // pred_check_branch
    %12 = sbr.rel (0) target = $region9
  $region8: #{block_output_wrapper_forward.10} parent=0 // pred_region
    _
  $region9: #{block_output_wrapper_forward.10} parent=0 // pred_fallthru
    _
  // Predicated region
  $region10: #{block_output_wrapper_forward.10} parent=0 // pred_check
    _
  $region11: #{block_output_wrapper_forward.10} parent=0 // pred_check_branch
    %14 = sbr.rel (0) target = $region13
  $region12: #{block_output_wrapper_forward.10} parent=0 // pred_region
    _
  $region13: #{block_output_wrapper_forward.10} parent=0 // pred_fallthru
    _
  // Predicated region
  $region14: #{block_output_wrapper_forward.10} parent=0 // pred_check
    _
  $region15: #{block_output_wrapper_forward.10} parent=0 // pred_check_branch
    %16 = sbr.rel (0) target = $region17
  $region16: #{block_output_wrapper_forward.10} parent=0 // pred_region
    _
  $region17: #{block_output_wrapper_forward.10} parent=0 // pred_fallthru
    _
  %v18 = vld [vmem:[%s0] sm:$0xf]
  %v19 = vld [vmem:[%s0 + $0x4] sm:$0xf]
  %v20 = vunpack.c.l.bf16 %v18
  %v21 = vunpack.c.l.bf16 %v19
  %v22 = vmul.f32 %v20, %v20
  %v23 = vmul.f32 %v21, %v21
  %vm24 = vcmask 261120
  %v25 = vsel %vm24, %v22, 0.0
  %26 = vadd.xlane.f32.xlu0 %v25
  %v27 = vpop.xlane.xlu0 %26
  %v28 = vsel %vm24, %v23, 0.0
  %29 = vadd.xlane.f32.xlu0 %v28
  %v30 = vpop.xlane.xlu0 %29
  %v31 = vrcp.pop 32.0
  %v32 = vmul.f32 %v27, %v31
  %v33 = vmul.f32 %v30, %v31
  %v34 = vadd.f32 %v32, 1e-06
  %v35 = vadd.f32 %v33, 1e-06
  %v36 = vrsqrt.pop %v34
  %v37 = vrsqrt.pop %v35
  %v38 = vmul.f32 %v20, %v36
  %v39 = vmul.f32 %v21, %v37
  %v40 = vld [vmem:[%s1] sm:$0x1]
  %v42 = vlaneseq
  %v43 = vshrl.u32 %v42, 7
  %v44 = vsub.s32 0, %v43
  %v45 = vrot.slane %v40, %v44
  %v47 = vmul.f32 %v38, %v45
  %v48 = vmul.f32 %v39, %v45
  %v49 = vpack.c.bf16 %v48, %v47
  %v50 = vld [vmem:[%s2] sm:$0xf]
  %v51 = vld [vmem:[%s2 + $0x4] sm:$0xf]
  %v52 = vld [vmem:[%s2 + $0x8] sm:$0xf]
  %v53 = vld [vmem:[%s2 + $0xc] sm:$0xf]
  %v58 = vunpack.c.l.b16 %v50
  %v59 = vunpack.c.l.b16 %v51
  %v60 = vunpack.c.l.b16 %v52
  %v61 = vunpack.c.l.b16 %v53
  %v62 = vpack.c.b16 %v59, %v58
  %v63 = vpack.c.b16 %v61, %v60
  %v67 = vsel %vm24, %v49, 0
  %69 = vmatprep.subr.bf16.mxu0 0
  %70 = vmatpush1.bf16.msra.mxu0 %v62
  %71 = vmatprep.subr.bf16.mxu0 0
  %72 = vmatpush1.bf16.msra.mxu0 %v63
  %73 = vmatprep.subr.bf16.mxu0 0
  %74 = vmatpush1.bf16.msra.mxu0 0
  %75 = vmatprep.subr.bf16.mxu0 0
  %76 = vmatpush1.bf16.msra.mxu0 0
  %77 = vmatprep.subr.bf16.mxu0 0
  %78 = vmatpush1.bf16.msra.mxu0 0
  %79 = vmatprep.subr.bf16.mxu0 0
  %80 = vmatpush1.bf16.msra.mxu0 0
  %81 = vmatprep.subr.bf16.mxu0 0
  %82 = vmatpush1.bf16.msra.mxu0 0
  %83 = vmatprep.subr.bf16.mxu0 0
  %84 = vmatpush1.bf16.msra.mxu0 0
  %85 = vmatprep.subr.bf16.mxu0 0
  %86 = vmatpush1.bf16.msra.mxu0 0
  %87 = vmatprep.subr.bf16.mxu0 0
  %88 = vmatpush1.bf16.msra.mxu0 0
  %89 = vmatprep.subr.bf16.mxu0 0
  %90 = vmatpush1.bf16.msra.mxu0 0
  %91 = vmatprep.subr.bf16.mxu0 0
  %92 = vmatpush1.bf16.msra.mxu0 0
  %93 = vmatprep.subr.bf16.mxu0 0
  %94 = vmatpush1.bf16.msra.mxu0 0
  %95 = vmatprep.subr.bf16.mxu0 0
  %96 = vmatpush1.bf16.msra.mxu0 0
  %97 = vmatprep.subr.bf16.mxu0 0
  %98 = vmatpush1.bf16.msra.mxu0 0
  %99 = vmatprep.subr.bf16.mxu0 0
  %100 = vmatpush1.bf16.msra.mxu0 0
  %101 = vmatprep.mubr.bf16.mxu0 0
  %102 = vmatmul.mubr.bf16.gmra.mrb[0].mxu0 %v67
  %v103 = vpop.f32.mrb[0].mxu0
  %v104 = vadd.f32 0.0, %v103
  %v105 = vpop.f32.mrb[0].mxu0
  %v106 = vpop.f32.mrb[0].mxu0
  %v107 = vadd.f32 0.0, %v106
  %v108 = vpop.f32.mrb[0].mxu0
  %109 = vdwg.mxu0
  %v110 = vld [vmem:[%s3] sm:$0xf]
  %v111 = vld [vmem:[%s3 + $0x4] sm:$0xf]
  %v112 = vld [vmem:[%s3 + $0x8] sm:$0xf]
  %v113 = vld [vmem:[%s3 + $0xc] sm:$0xf]
  %v118 = vunpack.c.l.b16 %v110
  %v119 = vunpack.c.l.b16 %v111
  %v120 = vunpack.c.l.b16 %v112
  %v121 = vunpack.c.l.b16 %v113
  %v122 = vpack.c.b16 %v119, %v118
  %v123 = vpack.c.b16 %v121, %v120
  %126 = vmatprep.subr.bf16.mxu0 0
  %127 = vmatpush1.bf16.msra.mxu0 %v122
  %128 = vmatprep.subr.bf16.mxu0 0
  %129 = vmatpush1.bf16.msra.mxu0 %v123
  %130 = vmatprep.subr.bf16.mxu0 0
  %131 = vmatpush1.bf16.msra.mxu0 0
  %132 = vmatprep.subr.bf16.mxu0 0
  %133 = vmatpush1.bf16.msra.mxu0 0
  %134 = vmatprep.subr.bf16.mxu0 0
  %135 = vmatpush1.bf16.msra.mxu0 0
  %136 = vmatprep.subr.bf16.mxu0 0
  %137 = vmatpush1.bf16.msra.mxu0 0
  %138 = vmatprep.subr.bf16.mxu0 0
  %139 = vmatpush1.bf16.msra.mxu0 0
  %140 = vmatprep.subr.bf16.mxu0 0
  %141 = vmatpush1.bf16.msra.mxu0 0
  %142 = vmatprep.subr.bf16.mxu0 0
  %143 = vmatpush1.bf16.msra.mxu0 0
  %144 = vmatprep.subr.bf16.mxu0 0
  %145 = vmatpush1.bf16.msra.mxu0 0
  %146 = vmatprep.subr.bf16.mxu0 0
  %147 = vmatpush1.bf16.msra.mxu0 0
  %148 = vmatprep.subr.bf16.mxu0 0
  %149 = vmatpush1.bf16.msra.mxu0 0
  %150 = vmatprep.subr.bf16.mxu0 0
  %151 = vmatpush1.bf16.msra.mxu0 0
  %152 = vmatprep.subr.bf16.mxu0 0
  %153 = vmatpush1.bf16.msra.mxu0 0
  %154 = vmatprep.subr.bf16.mxu0 0
  %155 = vmatpush1.bf16.msra.mxu0 0
  %156 = vmatprep.subr.bf16.mxu0 0
  %157 = vmatpush1.bf16.msra.mxu0 0
  %158 = vmatprep.mubr.bf16.mxu0 0
  %159 = vmatmul.mubr.bf16.gmra.mrb[0].mxu0 %v67
  %v160 = vpop.f32.mrb[0].mxu0
  %v161 = vadd.f32 0.0, %v160
  %v162 = vpop.f32.mrb[0].mxu0
  %v163 = vpop.f32.mrb[0].mxu0
  %v164 = vadd.f32 0.0, %v163
  %v165 = vpop.f32.mrb[0].mxu0
  %166 = vdwg.mxu0
  %v167 = vxor.u32 %v104, 2147483648
  %v168 = vxor.u32 %v107, 2147483648
  %v169 = vmul.f32 %v167, 1.442695
  %v170 = vpow.pop %v169
  %v171 = vmul.f32 %v168, 1.442695
  %v172 = vpow.pop %v171
  %v173 = vadd.f32 %v170, 1.0
  %v174 = vadd.f32 %v172, 1.0
  %v175 = vrcp.pop %v173
  %v176 = vmul.f32 1.0, %v175
  %v177 = vrcp.pop %v174
  %v178 = vmul.f32 1.0, %v177
  %v179 = vmul.f32 %v104, %v176
  %v180 = vmul.f32 %v107, %v178
  %v181 = vmul.f32 %v179, %v161
  %v182 = vmul.f32 %v180, %v164
  %v183 = vpack.c.bf16 %v182, %v181
  %v185 = vunpack.c.l.b16 %v183
  %v186 = vunpack.c.h.b16 %v183
  %v187 = vpack.c.b16 %v185, %v185
  %v188 = vpack.c.b16 %v186, %v186
  %vm191 = vcmask 519168
  %192 = vst.msk [vmem:[%s4] sm:$0xf] %vm191, %v187
  %193 = vst.msk [vmem:[%s4 + $0x4] sm:$0xf] %vm191, %v188
  // Predicated region
  $region18: #{block_output_wrapper_forward.10} parent=0 // pred_check
    _
  $region19: #{block_output_wrapper_forward.10} parent=0 // pred_check_branch
    %195 = sbr.rel (0) target = $region21
  $region20: #{block_output_wrapper_forward.10} parent=0 // pred_region
    _
  $region21: #{block_output_wrapper_forward.10} parent=0 // pred_fallthru
    _
  // Predicated region
  $region22: #{block_output_wrapper_forward.10} parent=0 // pred_check
    _
  $region23: #{block_output_wrapper_forward.10} parent=0 // pred_check_branch
    %197 = sbr.rel (0) target = $region25
  $region24: #{block_output_wrapper_forward.10} parent=0 // pred_region
    _
  $region25: #{block_output_wrapper_forward.10} parent=0 // pred_fallthru
    _

// kernel: block_output_wrapper_forward.9
$region0: #{block_output_wrapper_forward.9}
  #allocation0 [shape = 'u32[]', space=smem, size = 0x4, offset = 0x4, fixed_abs, tag = 'smem constant byte address 0x4 - core index']
  #allocation1 [shape = 'u32[144,128]{1,0:T(1,128)}', space=vmem, size = 0x12000, scoped, tag = 'internal scratch']
  %s0 = inlined_call_operand.vmem [shape: bf16[16,32], index: 0, kind: input, shape index: {}]
  %s1 = inlined_call_operand.vmem [shape: bf16[32,32], index: 1, kind: input, shape index: {}]
  %s2 = inlined_call_operand.vmem [shape: bf16[16,32], index: 2, kind: input, shape index: {}]
  %s3 = inlined_call_operand.vmem [shape: bf16[16,32], index: 3, kind: output, shape index: {0}]
  %s4 = inlined_call_operand.vmem [shape: bf16[16,32], index: 4, kind: output, shape index: {1}]
  %5 = xla_tuple %s3, %s4
  %s6 = sld [smem:[#allocation0]]
  $region30: #{block_output_wrapper_forward.9} parent=0
    _
  %s8 = ssub.s32 1, %s6
  %s9 = scalar_select 0, %s8, %s6
  // Predicated region
  $region2: #{block_output_wrapper_forward.9} parent=0 // pred_check
    _
  $region3: #{block_output_wrapper_forward.9} parent=0 // pred_check_branch
    %11 = sbr.rel (0) target = $region5
  $region4: #{block_output_wrapper_forward.9} parent=0 // pred_region
    _
  $region5: #{block_output_wrapper_forward.9} parent=0 // pred_fallthru
    _
  // Predicated region
  $region6: #{block_output_wrapper_forward.9} parent=0 // pred_check
    _
  $region7: #{block_output_wrapper_forward.9} parent=0 // pred_check_branch
    %13 = sbr.rel (0) target = $region9
  $region8: #{block_output_wrapper_forward.9} parent=0 // pred_region
    _
  $region9: #{block_output_wrapper_forward.9} parent=0 // pred_fallthru
    _
  // Predicated region
  $region10: #{block_output_wrapper_forward.9} parent=0 // pred_check
    _
  $region11: #{block_output_wrapper_forward.9} parent=0 // pred_check_branch
    %15 = sbr.rel (0) target = $region13
  $region12: #{block_output_wrapper_forward.9} parent=0 // pred_region
    _
  $region13: #{block_output_wrapper_forward.9} parent=0 // pred_fallthru
    _
  %v17 = vld [vmem:[%s0] sm:$0xf]
  %v18 = vld [vmem:[%s0 + $0x4] sm:$0xf]
  %v19 = vld [vmem:[%s1] sm:$0xf]
  %v20 = vld [vmem:[%s1 + $0x4] sm:$0xf]
  %v21 = vld [vmem:[%s1 + $0x8] sm:$0xf]
  %v22 = vld [vmem:[%s1 + $0xc] sm:$0xf]
  %v25 = vunpack.c.l.b16 %v17
  %v26 = vunpack.c.l.b16 %v18
  %v27 = vpack.c.b16 %v26, %v25
  %v32 = vunpack.c.l.b16 %v19
  %v33 = vunpack.c.l.b16 %v20
  %v34 = vunpack.c.l.b16 %v21
  %v35 = vunpack.c.l.b16 %v22
  %v36 = vpack.c.b16 %v33, %v32
  %v37 = vpack.c.b16 %v35, %v34
  %vm40 = vcmask 261120
  %v42 = vsel %vm40, %v27, 0
  %44 = vmatprep.subr.bf16.mxu0 0
  %45 = vmatpush1.bf16.msra.mxu0 %v36
  %46 = vmatprep.subr.bf16.mxu0 0
  %47 = vmatpush1.bf16.msra.mxu0 %v37
  %48 = vmatprep.subr.bf16.mxu0 0
  %49 = vmatpush1.bf16.msra.mxu0 0
  %50 = vmatprep.subr.bf16.mxu0 0
  %51 = vmatpush1.bf16.msra.mxu0 0
  %52 = vmatprep.subr.bf16.mxu0 0
  %53 = vmatpush1.bf16.msra.mxu0 0
  %54 = vmatprep.subr.bf16.mxu0 0
  %55 = vmatpush1.bf16.msra.mxu0 0
  %56 = vmatprep.subr.bf16.mxu0 0
  %57 = vmatpush1.bf16.msra.mxu0 0
  %58 = vmatprep.subr.bf16.mxu0 0
  %59 = vmatpush1.bf16.msra.mxu0 0
  %60 = vmatprep.subr.bf16.mxu0 0
  %61 = vmatpush1.bf16.msra.mxu0 0
  %62 = vmatprep.subr.bf16.mxu0 0
  %63 = vmatpush1.bf16.msra.mxu0 0
  %64 = vmatprep.subr.bf16.mxu0 0
  %65 = vmatpush1.bf16.msra.mxu0 0
  %66 = vmatprep.subr.bf16.mxu0 0
  %67 = vmatpush1.bf16.msra.mxu0 0
  %68 = vmatprep.subr.bf16.mxu0 0
  %69 = vmatpush1.bf16.msra.mxu0 0
  %70 = vmatprep.subr.bf16.mxu0 0
  %71 = vmatpush1.bf16.msra.mxu0 0
  %72 = vmatprep.subr.bf16.mxu0 0
  %73 = vmatpush1.bf16.msra.mxu0 0
  %74 = vmatprep.subr.bf16.mxu0 0
  %75 = vmatpush1.bf16.msra.mxu0 0
  %76 = vmatprep.mubr.bf16.mxu0 0
  %77 = vmatmul.mubr.bf16.gmra.mrb[0].mxu0 %v42
  %v78 = vpop.f32.mrb[0].mxu0
  %v79 = vadd.f32 0.0, %v78
  %v80 = vpop.f32.mrb[0].mxu0
  %v81 = vpop.f32.mrb[0].mxu0
  %v82 = vadd.f32 0.0, %v81
  %v83 = vpop.f32.mrb[0].mxu0
  %84 = vdwg.mxu0
  %v85 = vpack.c.bf16 %v82, %v79
  %v87 = vunpack.c.l.b16 %v85
  %v88 = vunpack.c.h.b16 %v85
  %v89 = vpack.c.b16 %v87, %v87
  %v90 = vpack.c.b16 %v88, %v88
  %vm93 = vcmask 257024
  %94 = vst.msk [vmem:[%s3] sm:$0xf] %vm93, %v89
  %95 = vst.msk [vmem:[%s3 + $0x4] sm:$0xf] %vm93, %v90
  %v96 = vld [vmem:[%s2] sm:$0xf]
  %v97 = vld [vmem:[%s2 + $0x4] sm:$0xf]
  %v98 = vunpack.c.l.bf16 %v96
  %v99 = vunpack.c.l.bf16 %v97
  %v100 = vadd.f32 %v79, %v98
  %v101 = vadd.f32 %v82, %v99
  %v102 = vpack.c.bf16 %v101, %v100
  %v104 = vunpack.c.l.b16 %v102
  %v105 = vunpack.c.h.b16 %v102
  %v106 = vpack.c.b16 %v104, %v104
  %v107 = vpack.c.b16 %v105, %v105
  %110 = vst.msk [vmem:[%s4] sm:$0xf] %vm93, %v106
  %111 = vst.msk [vmem:[%s4 + $0x4] sm:$0xf] %vm93, %v107
  // Predicated region
  $region14: #{block_output_wrapper_forward.9} parent=0 // pred_check
    _
  $region15: #{block_output_wrapper_forward.9} parent=0 // pred_check_branch
    %113 = sbr.rel (0) target = $region17
  $region16: #{block_output_wrapper_forward.9} parent=0 // pred_region
    _
  $region17: #{block_output_wrapper_forward.9} parent=0 // pred_fallthru
    _
  // Predicated region
  $region18: #{block_output_wrapper_forward.9} parent=0 // pred_check
    _
  $region19: #{block_output_wrapper_forward.9} parent=0 // pred_check_branch
    %115 = sbr.rel (0) target = $region21
  $region20: #{block_output_wrapper_forward.9} parent=0 // pred_region
    _
  $region21: #{block_output_wrapper_forward.9} parent=0 // pred_fallthru
    _
  // Predicated region
  $region22: #{block_output_wrapper_forward.9} parent=0 // pred_check
    _
  $region23: #{block_output_wrapper_forward.9} parent=0 // pred_check_branch
    %117 = sbr.rel (0) target = $region25
  $region24: #{block_output_wrapper_forward.9} parent=0 // pred_region
    _
  $region25: #{block_output_wrapper_forward.9} parent=0 // pred_fallthru
    _
  // Predicated region
  $region26: #{block_output_wrapper_forward.9} parent=0 // pred_check
    _
  $region27: #{block_output_wrapper_forward.9} parent=0 // pred_check_branch
    %119 = sbr.rel (0) target = $region29
  $region28: #{block_output_wrapper_forward.9} parent=0 // pred_region
    _
  $region29: #{block_output_wrapper_forward.9} parent=0 // pred_fallthru
    _

// kernel: block_output_wrapper_forward.8
$region0: #{block_output_wrapper_forward.8}
  #allocation0 [shape = 'u32[]', space=smem, size = 0x4, offset = 0x4, fixed_abs, tag = 'smem constant byte address 0x4 - core index']
  #allocation1 [shape = 'u32[144,128]{1,0:T(1,128)}', space=vmem, size = 0x12000, scoped, tag = 'internal scratch']
  #allocation2 [shape = 'f32[8,1]{1,0:T(8,128)}', space=vmem, size = 0x1000, scoped, tag = 'scratch operand']
  #allocation3 [shape = 'f32[8,1]{1,0:T(8,128)}', space=vmem, size = 0x1000, scoped, tag = 'scratch operand']
  #allocation4 [shape = 'f32[8,8]{1,0:T(8,128)}', space=vmem, size = 0x1000, scoped, tag = 'scratch operand']
  %s0 = inlined_call_operand.vmem [shape: bf16[8,8,8], index: 0, kind: input, shape index: {}]
  %s1 = inlined_call_operand.vmem [shape: bf16[8,8,8], index: 1, kind: input, shape index: {}]
  %s2 = inlined_call_operand.vmem [shape: bf16[8,8,8], index: 2, kind: input, shape index: {}]
  %s3 = inlined_call_operand.vmem [shape: bf16[8,8,8], index: 3, kind: output, shape index: {}]
  %s4 = sld [smem:[#allocation0]]
  $region57: #{block_output_wrapper_forward.8} parent=0
    _
  %s6 = ssub.s32 1, %s4
  %s7 = scalar_select 0, %s6, %s4
  loop: start=0, step=1, limit=10
  $region2: #{block_output_wrapper_forward.8} parent=0 // loop_pre_header
    _
  $region3: #{block_output_wrapper_forward.8} parent=0 // loop_header
    %s9 = sphi 0, %s13
    %p10 = scmp.ge.s32.totalorder %s9, 10
    %s16 = sphi 0, %s35
    %s17 = sphi 0, %s31
    %s18 = sphi 0, %s27
    %s19 = sphi 0, %s16
    %s20 = sphi 0, %s17
    %s21 = sphi 0, %s18
    %s22 = sphi 0, %s19
    %s23 = sphi 0, %s20
    %s24 = sphi 0, %s21
    %s40 = sphi 0, %s42
    %s43 = sphi 0, %s40
    %s44 = sphi 0, %s43
    %s60 = sphi 0, %s44
    %s68 = sphi 0, %s70
    %s71 = sphi 0, %s68
    %s72 = sphi 0, %s71
    %s88 = sphi 0, %s72
    %s96 = sphi 0, %s98
    %s99 = sphi 0, %s96
    %s100 = sphi 0, %s99
    %s116 = sphi 0, %s100
    %s124 = sphi 0, %s126
    %s127 = sphi 0, %s124
    %s128 = sphi 0, %s127
    %s144 = sphi 0, %s128
  $region4: #{block_output_wrapper_forward.8} parent=0 // loop_header_branch
    %12 = sbr.rel (%p10) target = $region8
  $region5: #{block_output_wrapper_forward.8} parent=0 // loop_body
    %s14 = ssub.s32 %s9, 1
    %s15 = ssub.s32 %s9, 2
    %s25 = sadd.s32 1, %s18
    %p26 = scmp.ge.s32.totalorder %s25, 1
    %s27 = scalar_select %p26, 0, %s25
    %s28 = sadd.s32 1, %s17
    %s29 = scalar_select %p26, %s28, %s17
    %p30 = scmp.ge.s32.totalorder %s29, 1
    %s31 = scalar_select %p30, 0, %s29
    %s32 = sadd.s32 1, %s16
    %s33 = scalar_select %p30, %s32, %s16
    %p34 = scmp.ge.s32.totalorder %s33, 8
    %s35 = scalar_select %p34, 0, %s33
    %s36 = ssub.s32 %s16, %s35
    %s37 = ssub.s32 %s17, %s31
    %s38 = sor.u32 %s36, %s37
    %p39 = scmp.eq.s32.totalorder %s38, 0
    %s41 = sadd.s32 %s40, 1
    %s42 = scalar_select %p39, %s40, %s41
    %p45 = pneg %p39
    %p46 = scmp.eq.s32.totalorder %s9, 7
    %p47 = por %p45, %p46
    %p48 = scmp.ne.s32.totalorder %s40, %s43
    %p49 = scmp.eq.s32.totalorder %s9, 0
    %p50 = por %p48, %p49
    %p51 = scmp.ne.s32.totalorder %s40, %s43
    %p52 = scmp.eq.s32.totalorder %s14, 7
    %p53 = por %p51, %p52
    %p54 = scmp.ne.s32.totalorder %s43, %s44
    %p55 = scmp.eq.s32.totalorder %s14, 0
    %p56 = por %p54, %p55
    %p57 = scmp.ne.s32.totalorder %s43, %s44
    %p58 = scmp.eq.s32.totalorder %s15, 7
    %p59 = por %p57, %p58
    %p61 = scmp.ne.s32.totalorder %s44, %s60
    %p62 = scmp.eq.s32.totalorder %s15, 0
    %p63 = por %p61, %p62
    %s64 = ssub.s32 %s16, %s35
    %s65 = ssub.s32 %s18, %s27
    %s66 = sor.u32 %s64, %s65
    %p67 = scmp.eq.s32.totalorder %s66, 0
    %s69 = sadd.s32 %s68, 1
    %s70 = scalar_select %p67, %s68, %s69
    %p73 = pneg %p67
    %p74 = scmp.eq.s32.totalorder %s9, 7
    %p75 = por %p73, %p74
    %p76 = scmp.ne.s32.totalorder %s68, %s71
    %p77 = scmp.eq.s32.totalorder %s9, 0
    %p78 = por %p76, %p77
    %p79 = scmp.ne.s32.totalorder %s68, %s71
    %p80 = scmp.eq.s32.totalorder %s14, 7
    %p81 = por %p79, %p80
    %p82 = scmp.ne.s32.totalorder %s71, %s72
    %p83 = scmp.eq.s32.totalorder %s14, 0
    %p84 = por %p82, %p83
    %p85 = scmp.ne.s32.totalorder %s71, %s72
    %p86 = scmp.eq.s32.totalorder %s15, 7
    %p87 = por %p85, %p86
    %p89 = scmp.ne.s32.totalorder %s72, %s88
    %p90 = scmp.eq.s32.totalorder %s15, 0
    %p91 = por %p89, %p90
    %s92 = ssub.s32 %s16, %s35
    %s93 = ssub.s32 %s18, %s27
    %s94 = sor.u32 %s92, %s93
    %p95 = scmp.eq.s32.totalorder %s94, 0
    %s97 = sadd.s32 %s96, 1
    %s98 = scalar_select %p95, %s96, %s97
    %p101 = pneg %p95
    %p102 = scmp.eq.s32.totalorder %s9, 7
    %p103 = por %p101, %p102
    %p104 = scmp.ne.s32.totalorder %s96, %s99
    %p105 = scmp.eq.s32.totalorder %s9, 0
    %p106 = por %p104, %p105
    %p107 = scmp.ne.s32.totalorder %s96, %s99
    %p108 = scmp.eq.s32.totalorder %s14, 7
    %p109 = por %p107, %p108
    %p110 = scmp.ne.s32.totalorder %s99, %s100
    %p111 = scmp.eq.s32.totalorder %s14, 0
    %p112 = por %p110, %p111
    %p113 = scmp.ne.s32.totalorder %s99, %s100
    %p114 = scmp.eq.s32.totalorder %s15, 7
    %p115 = por %p113, %p114
    %p117 = scmp.ne.s32.totalorder %s100, %s116
    %p118 = scmp.eq.s32.totalorder %s15, 0
    %p119 = por %p117, %p118
    %s120 = ssub.s32 %s16, %s35
    %s121 = ssub.s32 %s17, %s31
    %s122 = sor.u32 %s120, %s121
    %p123 = scmp.eq.s32.totalorder %s122, 0
    %s125 = sadd.s32 %s124, 1
    %s126 = scalar_select %p123, %s124, %s125
    %p129 = pneg %p123
    %p130 = scmp.eq.s32.totalorder %s9, 7
    %p131 = por %p129, %p130
    %p132 = scmp.ne.s32.totalorder %s124, %s127
    %p133 = scmp.eq.s32.totalorder %s9, 0
    %p134 = por %p132, %p133
    %p135 = scmp.ne.s32.totalorder %s124, %s127
    %p136 = scmp.eq.s32.totalorder %s14, 7
    %p137 = por %p135, %p136
    %p138 = scmp.ne.s32.totalorder %s127, %s128
    %p139 = scmp.eq.s32.totalorder %s14, 0
    %p140 = por %p138, %p139
    %p141 = scmp.ne.s32.totalorder %s127, %s128
    %p142 = scmp.eq.s32.totalorder %s15, 7
    %p143 = por %p141, %p142
    %p145 = scmp.ne.s32.totalorder %s128, %s144
    %p146 = scmp.eq.s32.totalorder %s15, 0
    %p147 = por %p145, %p146
    %p148 = scmp.le.s32.totalorder 1, %s9
    %p149 = scmp.lt.s32.totalorder %s9, 9
    %p150 = pnand %p148, %p149
    %p151 = pneg %p150
    // Predicated region
    $region9: #{block_output_wrapper_forward.8} parent=5 // pred_check
      _
    $region10: #{block_output_wrapper_forward.8} parent=5 // pred_check_branch
      %153 = sbr.rel (%p150) target = $region12
    $region11: #{block_output_wrapper_forward.8} parent=5 // pred_region
      %s154 = ssub.s32 %s9, 1
    $region12: #{block_output_wrapper_forward.8} parent=5 // pred_fallthru
      _
    %p155 = scmp.lt.s32.totalorder %s9, 8
    // Predicated region
    $region13: #{block_output_wrapper_forward.8} parent=5 // pred_check
      %p156 = pneg %p155
    $region14: #{block_output_wrapper_forward.8} parent=5 // pred_check_branch
      %158 = sbr.rel (%p156) target = $region16
    $region15: #{block_output_wrapper_forward.8} parent=5 // pred_region
      // Predicated region
      $region17: #{block_output_wrapper_forward.8} parent=15 // pred_check
        %p159 = pneg %p50
      $region18: #{block_output_wrapper_forward.8} parent=15 // pred_check_branch
        %161 = sbr.rel (%p159) target = $region20
      $region19: #{block_output_wrapper_forward.8} parent=15 // pred_region
        %p162 = scmp.lt.s32.totalorder %s16, 7
        %s163 = scalar_select %p162, %s16, 7
        %p164 = scmp.lt.s32.totalorder %s17, 0
        %s165 = scalar_select %p164, %s17, 0
        %s166 = sadd.s32 %s165, %s163
        %s167 = smul.addr %s166, 4
        %s168 = scalar_lea.vmem %s0, %s167
      $region20: #{block_output_wrapper_forward.8} parent=15 // pred_fallthru
        _
      // Predicated region
      $region21: #{block_output_wrapper_forward.8} parent=15 // pred_check
        %p169 = pneg %p78
      $region22: #{block_output_wrapper_forward.8} parent=15 // pred_check_branch
        %171 = sbr.rel (%p169) target = $region24
      $region23: #{block_output_wrapper_forward.8} parent=15 // pred_region
        %p172 = scmp.lt.s32.totalorder %s16, 7
        %s173 = scalar_select %p172, %s16, 7
        %p174 = scmp.lt.s32.totalorder %s18, 0
        %s175 = scalar_select %p174, %s18, 0
        %s176 = sadd.s32 %s175, %s173
        %s177 = smul.addr %s176, 4
        %s178 = scalar_lea.vmem %s1, %s177
      $region24: #{block_output_wrapper_forward.8} parent=15 // pred_fallthru
        _
      // Predicated region
      $region25: #{block_output_wrapper_forward.8} parent=15 // pred_check
        %p179 = pneg %p106
      $region26: #{block_output_wrapper_forward.8} parent=15 // pred_check_branch
        %181 = sbr.rel (%p179) target = $region28
      $region27: #{block_output_wrapper_forward.8} parent=15 // pred_region
        %p182 = scmp.lt.s32.totalorder %s16, 7
        %s183 = scalar_select %p182, %s16, 7
        %p184 = scmp.lt.s32.totalorder %s18, 0
        %s185 = scalar_select %p184, %s18, 0
        %s186 = sadd.s32 %s185, %s183
        %s187 = smul.addr %s186, 4
        %s188 = scalar_lea.vmem %s2, %s187
      $region28: #{block_output_wrapper_forward.8} parent=15 // pred_fallthru
        _
    $region16: #{block_output_wrapper_forward.8} parent=5 // pred_fallthru
      _
    %p189 = scmp.le.s32.totalorder 1, %s9
    %p190 = scmp.lt.s32.totalorder %s9, 9
    %p191 = pnand %p189, %p190
    %p192 = pneg %p191
    // Predicated region
    $region29: #{block_output_wrapper_forward.8} parent=5 // pred_check
      _
    $region30: #{block_output_wrapper_forward.8} parent=5 // pred_check_branch
      %194 = sbr.rel (%p191) target = $region32
    $region31: #{block_output_wrapper_forward.8} parent=5 // pred_region
      %s195 = ssub.s32 %s9, 1
      %p196 = scmp.lt.s32.totalorder %s19, 7
      %s197 = scalar_select %p196, %s19, 7
      %p198 = scmp.lt.s32.totalorder %s20, 0
      %s199 = scalar_select %p198, %s20, 0
      %s200 = sadd.s32 %s199, %s197
      %s201 = smul.addr %s200, 4
      %s202 = scalar_lea.vmem %s0, %s201
      %p203 = pneg %p56
      %p204 = pneg %p53
      %p205 = scmp.lt.s32.totalorder %s19, 7
      %s206 = scalar_select %p205, %s19, 7
      %p207 = scmp.lt.s32.totalorder %s21, 0
      %s208 = scalar_select %p207, %s21, 0
      %s209 = sadd.s32 %s208, %s206
      %s210 = smul.addr %s209, 4
      %s211 = scalar_lea.vmem %s1, %s210
      %p212 = pneg %p84
      %p213 = pneg %p81
      %p214 = scmp.lt.s32.totalorder %s19, 7
      %s215 = scalar_select %p214, %s19, 7
      %p216 = scmp.lt.s32.totalorder %s21, 0
      %s217 = scalar_select %p216, %s21, 0
      %s218 = sadd.s32 %s217, %s215
      %s219 = smul.addr %s218, 4
      %s220 = scalar_lea.vmem %s2, %s219
      %p221 = pneg %p112
      %p222 = pneg %p109
      %p223 = pneg %p140
      %p224 = pneg %p137
      %p225 = scmp.lt.s32.totalorder %s19, 7
      %s226 = scalar_select %p225, %s19, 7
      %p227 = scmp.lt.s32.totalorder %s20, 0
      %s228 = scalar_select %p227, %s20, 0
      %s229 = sadd.s32 %s228, %s226
      %s230 = smul.addr %s229, 4
      %s231 = scalar_lea.vmem %s3, %s230
      %p232 = scmp.lt.s32.totalorder %s19, 7
      %s233 = scalar_select %p232, %s19, 7
      %p234 = scmp.lt.s32.totalorder %s20, 0
      %s235 = scalar_select %p234, %s20, 0
      %s236 = sadd.s32 %s235, %s233
      %s237 = smul.addr %s236, 4
      %s238 = scalar_lea.vmem %s0, %s237
      %p239 = scmp.lt.s32.totalorder %s19, 7
      %s240 = scalar_select %p239, %s19, 7
      %p241 = scmp.lt.s32.totalorder %s21, 0
      %s242 = scalar_select %p241, %s21, 0
      %s243 = sadd.s32 %s242, %s240
      %s244 = smul.addr %s243, 4
      %s245 = scalar_lea.vmem %s1, %s244
      %p246 = scmp.lt.s32.totalorder %s19, 7
      %s247 = scalar_select %p246, %s19, 7
      %p248 = scmp.lt.s32.totalorder %s21, 0
      %s249 = scalar_select %p248, %s21, 0
      %s250 = sadd.s32 %s249, %s247
      %s251 = smul.addr %s250, 4
      %s252 = scalar_lea.vmem %s2, %s251
      %p253 = scmp.lt.s32.totalorder %s19, 7
      %s254 = scalar_select %p253, %s19, 7
      %p255 = scmp.lt.s32.totalorder %s20, 0
      %s256 = scalar_select %p255, %s20, 0
      %s257 = sadd.s32 %s256, %s254
      %s258 = smul.addr %s257, 4
      %s259 = scalar_lea.vmem %s3, %s258
      %p261 = scmp.eq.s32.totalorder %s21, 0
      // Predicated region
      $region33: #{block_output_wrapper_forward.8} parent=31 // pred_check
        %p262 = pneg %p261
      $region34: #{block_output_wrapper_forward.8} parent=31 // pred_check_branch
        %264 = sbr.rel (%p262) target = $region36
      $region35: #{block_output_wrapper_forward.8} parent=31 // pred_region
        %vm265 = vcmask 7168
        %266 = vst.msk [vmem:[#allocation2] sm:$0xff] %vm265, -inf
        %267 = vst.msk [vmem:[#allocation3] sm:$0xff] %vm265, 0.0
        %vm268 = vcmask 64512
        %269 = vst.msk [vmem:[#allocation4] sm:$0xff] %vm268, 0.0
      $region36: #{block_output_wrapper_forward.8} parent=31 // pred_fallthru
        _
      %s270 = smul.u32 %s21, 8
      %s271 = sadd.s32 %s20, 1
      %s272 = smul.u32 %s271, 8
      %p273 = scmp.lt.s32.totalorder %s270, %s272
      // Predicated region
      $region37: #{block_output_wrapper_forward.8} parent=31 // pred_check
        %p274 = pneg %p273
      $region38: #{block_output_wrapper_forward.8} parent=31 // pred_check_branch
        %276 = sbr.rel (%p274) target = $region40
      $region39: #{block_output_wrapper_forward.8} parent=31 // pred_region
        %v277 = vld [vmem:[%s238] sm:$0xf]
        %v278 = vld [vmem:[%s245] sm:$0xf]
        %v279 = vld [vmem:[%s252] sm:$0xf]
        %vm280 = vcmask 64512
        %v282 = vsel %vm280, %v277, 0
        %v285 = vsel %vm280, %v278, 0
        %287 = vmatprep.subr.bf16.mxu0 0
        %288 = vmatpush1.bf16.xpose.msra.mxu0 %v285
        %289 = vmatprep.subr.bf16.mxu0 0
        %290 = vmatpush1.bf16.xpose.msra.mxu0 0
        %291 = vmatprep.subr.bf16.mxu0 0
        %292 = vmatpush1.bf16.xpose.msra.mxu0 0
        %293 = vmatprep.subr.bf16.mxu0 0
        %294 = vmatpush1.bf16.xpose.msra.mxu0 0
        %295 = vmatprep.subr.bf16.mxu0 0
        %296 = vmatpush1.bf16.xpose.msra.mxu0 0
        %297 = vmatprep.subr.bf16.mxu0 0
        %298 = vmatpush1.bf16.xpose.msra.mxu0 0
        %299 = vmatprep.subr.bf16.mxu0 0
        %300 = vmatpush1.bf16.xpose.msra.mxu0 0
        %301 = vmatprep.subr.bf16.mxu0 0
        %302 = vmatpush1.bf16.xpose.msra.mxu0 0
        %303 = vmatprep.subr.bf16.mxu0 0
        %304 = vmatpush1.bf16.xpose.msra.mxu0 0
        %305 = vmatprep.subr.bf16.mxu0 0
        %306 = vmatpush1.bf16.xpose.msra.mxu0 0
        %307 = vmatprep.subr.bf16.mxu0 0
        %308 = vmatpush1.bf16.xpose.msra.mxu0 0
        %309 = vmatprep.subr.bf16.mxu0 0
        %310 = vmatpush1.bf16.xpose.msra.mxu0 0
        %311 = vmatprep.subr.bf16.mxu0 0
        %312 = vmatpush1.bf16.xpose.msra.mxu0 0
        %313 = vmatprep.subr.bf16.mxu0 0
        %314 = vmatpush1.bf16.xpose.msra.mxu0 0
        %315 = vmatprep.subr.bf16.mxu0 0
        %316 = vmatpush1.bf16.xpose.msra.mxu0 0
        %317 = vmatprep.subr.bf16.mxu0 0
        %318 = vmatpush1.bf16.xpose.msra.mxu0 0
        %319 = vmatprep.mubr.bf16.mxu0 0
        %320 = vmatmul.mubr.bf16.gmra.mrb[0].mxu0 %v282
        %v321 = vpop.f32.mrb[0].mxu0
        %v322 = vadd.f32 0.0, %v321
        %v323 = vpop.f32.mrb[0].mxu0
        %v324 = vpop.f32.mrb[0].mxu0
        %v325 = vpop.f32.mrb[0].mxu0
        %326 = vdwg.mxu0
        %v327 = vmul.f32 %v322, 0.35355338
        %s328 = smul.u32 %s20, 8
        %v329 = vlaneseq
        %v330 = vshrl.u32 %v329, 7
        %v331 = vstv %s328
        %v332 = vadd.s32 %v331, %v330
        %v333 = vlaneseq
        %v334 = vand.u32 %v333, 127
        %v335 = vstv %s270
        %v336 = vadd.s32 %v335, %v334
        %vm337 = vcmp.le.s32.totalorder %v336, %v332
        %v338 = vsel %vm337, %v327, -1e+30
        %v339 = vld [vmem:[#allocation2] sm:$0xff]
        %v340 = vsel %vm280, %v338, -inf
        %341 = vmax.xlane.f32.xlu0 %v340
        %v342 = vpop.xlane.xlu0 %341
        %v343 = vmax.f32 %v339, %v342
        %v344 = vsub.f32 %v339, %v343
        %v345 = vmul.f32 %v344, 1.442695
        %v346 = vpow.pop %v345
        %348 = vset.pattern.permute.xlu0 0
        %349 = vperm.xlu0 %348, %v343
        %v350 = vpop.permute.xlu0 %349
        %v352 = vsub.f32 %v338, %v350
        %v353 = vmul.f32 %v352, 1.442695
        %v354 = vpow.pop %v353
        %v355 = vld [vmem:[#allocation3] sm:$0xff]
        %v356 = vmul.f32 %v346, %v355
        %v357 = vsel %vm280, %v354, 0.0
        %358 = vadd.xlane.f32.xlu0 %v357
        %v359 = vpop.xlane.xlu0 %358
        %v360 = vadd.f32 %v356, %v359
        %vm361 = vcmask 7168
        %362 = vst.msk [vmem:[#allocation3] sm:$0xff] %vm361, %v360
        %v363 = vld [vmem:[#allocation4] sm:$0xff]
        %365 = vset.pattern.permute.xlu0 0
        %366 = vperm.xlu0 %365, %v346
        %v367 = vpop.permute.xlu0 %366
        %v369 = vmul.f32 %v367, %v363
        %v370 = vpack.c.bf16 %v354, %v354
        %v372 = vsel %vm280, %v370, 0
        %vm374 = vcmask 1043456
        %v376 = vsel %vm374, %v279, 0
        %378 = vmatprep.subr.bf16.mxu0 0
        %379 = vmatpush1.bf16.msra.mxu0 %v376
        %380 = vmatprep.subr.bf16.mxu0 0
        %381 = vmatpush1.bf16.msra.mxu0 0
        %382 = vmatprep.subr.bf16.mxu0 0
        %383 = vmatpush1.bf16.msra.mxu0 0
        %384 = vmatprep.subr.bf16.mxu0 0
        %385 = vmatpush1.bf16.msra.mxu0 0
        %386 = vmatprep.subr.bf16.mxu0 0
        %387 = vmatpush1.bf16.msra.mxu0 0
        %388 = vmatprep.subr.bf16.mxu0 0
        %389 = vmatpush1.bf16.msra.mxu0 0
        %390 = vmatprep.subr.bf16.mxu0 0
        %391 = vmatpush1.bf16.msra.mxu0 0
        %392 = vmatprep.subr.bf16.mxu0 0
        %393 = vmatpush1.bf16.msra.mxu0 0
        %394 = vmatprep.subr.bf16.mxu0 0
        %395 = vmatpush1.bf16.msra.mxu0 0
        %396 = vmatprep.subr.bf16.mxu0 0
        %397 = vmatpush1.bf16.msra.mxu0 0
        %398 = vmatprep.subr.bf16.mxu0 0
        %399 = vmatpush1.bf16.msra.mxu0 0
        %400 = vmatprep.subr.bf16.mxu0 0
        %401 = vmatpush1.bf16.msra.mxu0 0
        %402 = vmatprep.subr.bf16.mxu0 0
        %403 = vmatpush1.bf16.msra.mxu0 0
        %404 = vmatprep.subr.bf16.mxu0 0
        %405 = vmatpush1.bf16.msra.mxu0 0
        %406 = vmatprep.subr.bf16.mxu0 0
        %407 = vmatpush1.bf16.msra.mxu0 0
        %408 = vmatprep.subr.bf16.mxu0 0
        %409 = vmatpush1.bf16.msra.mxu0 0
        %410 = vmatprep.mubr.bf16.mxu0 0
        %411 = vmatmul.mubr.bf16.gmra.mrb[0].mxu0 %v372
        %v412 = vpop.f32.mrb[0].mxu0
        %v413 = vadd.f32 0.0, %v412
        %v414 = vpop.f32.mrb[0].mxu0
        %v415 = vpop.f32.mrb[0].mxu0
        %v416 = vpop.f32.mrb[0].mxu0
        %417 = vdwg.mxu0
        %v418 = vadd.f32 %v369, %v413
        %419 = vst.msk [vmem:[#allocation4] sm:$0xff] %vm280, %v418
        %420 = vst.msk [vmem:[#allocation2] sm:$0xff] %vm361, %v343
      $region40: #{block_output_wrapper_forward.8} parent=31 // pred_fallthru
        _
      // Predicated region
      $region41: #{block_output_wrapper_forward.8} parent=31 // pred_check
        %p421 = pneg %p261
      $region42: #{block_output_wrapper_forward.8} parent=31 // pred_check_branch
        %423 = sbr.rel (%p421) target = $region44
      $region43: #{block_output_wrapper_forward.8} parent=31 // pred_region
        %v424 = vld [vmem:[#allocation4] sm:$0xff]
        %v425 = vld [vmem:[#allocation3] sm:$0xff]
        %v426 = vrcp.pop %v425
        %428 = vset.pattern.permute.xlu0 0
        %429 = vperm.xlu0 %428, %v426
        %v430 = vpop.permute.xlu0 %429
        %v432 = vmul.f32 %v424, %v430
        %v433 = vpack.c.bf16 %v432, %v432
        %vm434 = vcmask 60416
        %435 = vst.msk [vmem:[%s259] sm:$0xf] %vm434, %v433
      $region44: #{block_output_wrapper_forward.8} parent=31 // pred_fallthru
        _
      %p436 = scmp.lt.s32.totalorder %s19, 7
      %s437 = scalar_select %p436, %s19, 7
      %p438 = scmp.lt.s32.totalorder %s20, 0
      %s439 = scalar_select %p438, %s20, 0
      %s440 = sadd.s32 %s439, %s437
      %s441 = smul.addr %s440, 4
      %s442 = scalar_lea.vmem %s3, %s441
      // Predicated region
      $region45: #{block_output_wrapper_forward.8} parent=31 // pred_check
        %p443 = pneg %p137
      $region46: #{block_output_wrapper_forward.8} parent=31 // pred_check_branch
        %445 = sbr.rel (%p443) target = $region48
      $region47: #{block_output_wrapper_forward.8} parent=31 // pred_region
        _
      $region48: #{block_output_wrapper_forward.8} parent=31 // pred_fallthru
        _
    $region32: #{block_output_wrapper_forward.8} parent=5 // pred_fallthru
      _
    %p446 = scmp.le.s32.totalorder 2, %s9
    // Predicated region
    $region49: #{block_output_wrapper_forward.8} parent=5 // pred_check
      %p447 = pneg %p446
    $region50: #{block_output_wrapper_forward.8} parent=5 // pred_check_branch
      %449 = sbr.rel (%p447) target = $region52
    $region51: #{block_output_wrapper_forward.8} parent=5 // pred_region
      %s450 = ssub.s32 %s9, 2
      // Predicated region
      $region53: #{block_output_wrapper_forward.8} parent=51 // pred_check
        %p451 = pneg %p143
      $region54: #{block_output_wrapper_forward.8} parent=51 // pred_check_branch
        %453 = sbr.rel (%p451) target = $region56
      $region55: #{block_output_wrapper_forward.8} parent=51 // pred_region
        %p454 = scmp.lt.s32.totalorder %s22, 7
        %s455 = scalar_select %p454, %s22, 7
        %p456 = scmp.lt.s32.totalorder %s23, 0
        %s457 = scalar_select %p456, %s23, 0
        %s458 = sadd.s32 %s457, %s455
        %s459 = smul.addr %s458, 4
        %s460 = scalar_lea.vmem %s3, %s459
      $region56: #{block_output_wrapper_forward.8} parent=51 // pred_fallthru
        _
    $region52: #{block_output_wrapper_forward.8} parent=5 // pred_fallthru
      _
  $region6: #{block_output_wrapper_forward.8} parent=0 // loop_footer
    %s13 = sadd.s32 1, %s9
  $region7: #{block_output_wrapper_forward.8} parent=0 // loop_footer_branch
    %8 = sbr.rel target = $region3
  $region8: #{block_output_wrapper_forward.8} parent=0 // loop_exit
    _

// kernel: block_output_wrapper_forward.11
$region0: #{block_output_wrapper_forward.11}
  #allocation0 [shape = 'u32[]', space=smem, size = 0x4, offset = 0x4, fixed_abs, tag = 'smem constant byte address 0x4 - core index']
  #allocation1 [shape = 'u32[144,128]{1,0:T(1,128)}', space=vmem, size = 0x12000, scoped, tag = 'internal scratch']
  %s0 = inlined_call_operand.vmem [shape: bf16[16,64], index: 0, kind: input, shape index: {}]
  %s1 = inlined_call_operand.vmem [shape: bf16[64,32], index: 1, kind: input, shape index: {}]
  %s2 = inlined_call_operand.vmem [shape: bf16[16,32], index: 2, kind: input, shape index: {}]
  %s3 = inlined_call_operand.vmem [shape: bf16[16,32], index: 3, kind: output, shape index: {0}]
  %s4 = inlined_call_operand.vmem [shape: bf16[16,32], index: 4, kind: output, shape index: {1}]
  %5 = xla_tuple %s3, %s4
  %s6 = sld [smem:[#allocation0]]
  $region30: #{block_output_wrapper_forward.11} parent=0
    _
  %s8 = ssub.s32 1, %s6
  %s9 = scalar_select 0, %s8, %s6
  // Predicated region
  $region2: #{block_output_wrapper_forward.11} parent=0 // pred_check
    _
  $region3: #{block_output_wrapper_forward.11} parent=0 // pred_check_branch
    %11 = sbr.rel (0) target = $region5
  $region4: #{block_output_wrapper_forward.11} parent=0 // pred_region
    _
  $region5: #{block_output_wrapper_forward.11} parent=0 // pred_fallthru
    _
  // Predicated region
  $region6: #{block_output_wrapper_forward.11} parent=0 // pred_check
    _
  $region7: #{block_output_wrapper_forward.11} parent=0 // pred_check_branch
    %13 = sbr.rel (0) target = $region9
  $region8: #{block_output_wrapper_forward.11} parent=0 // pred_region
    _
  $region9: #{block_output_wrapper_forward.11} parent=0 // pred_fallthru
    _
  // Predicated region
  $region10: #{block_output_wrapper_forward.11} parent=0 // pred_check
    _
  $region11: #{block_output_wrapper_forward.11} parent=0 // pred_check_branch
    %15 = sbr.rel (0) target = $region13
  $region12: #{block_output_wrapper_forward.11} parent=0 // pred_region
    _
  $region13: #{block_output_wrapper_forward.11} parent=0 // pred_fallthru
    _
  %v17 = vld [vmem:[%s0] sm:$0xf]
  %v18 = vld [vmem:[%s0 + $0x4] sm:$0xf]
  %v19 = vld [vmem:[%s1] sm:$0xf]
  %v20 = vld [vmem:[%s1 + $0x4] sm:$0xf]
  %v21 = vld [vmem:[%s1 + $0x8] sm:$0xf]
  %v22 = vld [vmem:[%s1 + $0xc] sm:$0xf]
  %v23 = vld [vmem:[%s1 + $0x10] sm:$0xf]
  %v24 = vld [vmem:[%s1 + $0x14] sm:$0xf]
  %v25 = vld [vmem:[%s1 + $0x18] sm:$0xf]
  %v26 = vld [vmem:[%s1 + $0x1c] sm:$0xf]
  %v29 = vunpack.c.l.b16 %v17
  %v30 = vunpack.c.l.b16 %v18
  %v31 = vpack.c.b16 %v30, %v29
  %v40 = vunpack.c.l.b16 %v19
  %v41 = vunpack.c.l.b16 %v20
  %v42 = vunpack.c.l.b16 %v21
  %v43 = vunpack.c.l.b16 %v22
  %v44 = vunpack.c.l.b16 %v23
  %v45 = vunpack.c.l.b16 %v24
  %v46 = vunpack.c.l.b16 %v25
  %v47 = vunpack.c.l.b16 %v26
  %v48 = vpack.c.b16 %v41, %v40
  %v49 = vpack.c.b16 %v43, %v42
  %v50 = vpack.c.b16 %v45, %v44
  %v51 = vpack.c.b16 %v47, %v46
  %vm56 = vcmask 523264
  %v58 = vsel %vm56, %v31, 0
  %60 = vmatprep.subr.bf16.mxu0 0
  %61 = vmatpush1.bf16.msra.mxu0 %v48
  %62 = vmatprep.subr.bf16.mxu0 0
  %63 = vmatpush1.bf16.msra.mxu0 %v49
  %64 = vmatprep.subr.bf16.mxu0 0
  %65 = vmatpush1.bf16.msra.mxu0 %v50
  %66 = vmatprep.subr.bf16.mxu0 0
  %67 = vmatpush1.bf16.msra.mxu0 %v51
  %68 = vmatprep.subr.bf16.mxu0 0
  %69 = vmatpush1.bf16.msra.mxu0 0
  %70 = vmatprep.subr.bf16.mxu0 0
  %71 = vmatpush1.bf16.msra.mxu0 0
  %72 = vmatprep.subr.bf16.mxu0 0
  %73 = vmatpush1.bf16.msra.mxu0 0
  %74 = vmatprep.subr.bf16.mxu0 0
  %75 = vmatpush1.bf16.msra.mxu0 0
  %76 = vmatprep.subr.bf16.mxu0 0
  %77 = vmatpush1.bf16.msra.mxu0 0
  %78 = vmatprep.subr.bf16.mxu0 0
  %79 = vmatpush1.bf16.msra.mxu0 0
  %80 = vmatprep.subr.bf16.mxu0 0
  %81 = vmatpush1.bf16.msra.mxu0 0
  %82 = vmatprep.subr.bf16.mxu0 0
  %83 = vmatpush1.bf16.msra.mxu0 0
  %84 = vmatprep.subr.bf16.mxu0 0
  %85 = vmatpush1.bf16.msra.mxu0 0
  %86 = vmatprep.subr.bf16.mxu0 0
  %87 = vmatpush1.bf16.msra.mxu0 0
  %88 = vmatprep.subr.bf16.mxu0 0
  %89 = vmatpush1.bf16.msra.mxu0 0
  %90 = vmatprep.subr.bf16.mxu0 0
  %91 = vmatpush1.bf16.msra.mxu0 0
  %92 = vmatprep.mubr.bf16.mxu0 0
  %93 = vmatmul.mubr.bf16.gmra.mrb[0].mxu0 %v58
  %v94 = vpop.f32.mrb[0].mxu0
  %v95 = vadd.f32 0.0, %v94
  %v96 = vpop.f32.mrb[0].mxu0
  %v97 = vpop.f32.mrb[0].mxu0
  %v98 = vadd.f32 0.0, %v97
  %v99 = vpop.f32.mrb[0].mxu0
  %100 = vdwg.mxu0
  %v101 = vpack.c.bf16 %v98, %v95
  %v103 = vunpack.c.l.b16 %v101
  %v104 = vunpack.c.h.b16 %v101
  %v105 = vpack.c.b16 %v103, %v103
  %v106 = vpack.c.b16 %v104, %v104
  %vm109 = vcmask 257024
  %110 = vst.msk [vmem:[%s3] sm:$0xf] %vm109, %v105
  %111 = vst.msk [vmem:[%s3 + $0x4] sm:$0xf] %vm109, %v106
  %v112 = vld [vmem:[%s2] sm:$0xf]
  %v113 = vld [vmem:[%s2 + $0x4] sm:$0xf]
  %v114 = vunpack.c.l.bf16 %v112
  %v115 = vunpack.c.l.bf16 %v113
  %v116 = vadd.f32 %v95, %v114
  %v117 = vadd.f32 %v98, %v115
  %v118 = vpack.c.bf16 %v117, %v116
  %v120 = vunpack.c.l.b16 %v118
  %v121 = vunpack.c.h.b16 %v118
  %v122 = vpack.c.b16 %v120, %v120
  %v123 = vpack.c.b16 %v121, %v121
  %126 = vst.msk [vmem:[%s4] sm:$0xf] %vm109, %v122
  %127 = vst.msk [vmem:[%s4 + $0x4] sm:$0xf] %vm109, %v123
  // Predicated region
  $region14: #{block_output_wrapper_forward.11} parent=0 // pred_check
    _
  $region15: #{block_output_wrapper_forward.11} parent=0 // pred_check_branch
    %129 = sbr.rel (0) target = $region17
  $region16: #{block_output_wrapper_forward.11} parent=0 // pred_region
    _
  $region17: #{block_output_wrapper_forward.11} parent=0 // pred_fallthru
    _
  // Predicated region
  $region18: #{block_output_wrapper_forward.11} parent=0 // pred_check
    _
  $region19: #{block_output_wrapper_forward.11} parent=0 // pred_check_branch
    %131 = sbr.rel (0) target = $region21
  $region20: #{block_output_wrapper_forward.11} parent=0 // pred_region
    _
  $region21: #{block_output_wrapper_forward.11} parent=0 // pred_fallthru
    _
  // Predicated region
  $region22: #{block_output_wrapper_forward.11} parent=0 // pred_check
    _
  $region23: #{block_output_wrapper_forward.11} parent=0 // pred_check_branch
    %133 = sbr.rel (0) target = $region25
  $region24: #{block_output_wrapper_forward.11} parent=0 // pred_region
    _
  $region25: #{block_output_wrapper_forward.11} parent=0 // pred_fallthru
    _
  // Predicated region
  $region26: #{block_output_wrapper_forward.11} parent=0 // pred_check
    _
  $region27: #{block_output_wrapper_forward.11} parent=0 // pred_check_branch
    %135 = sbr.rel (0) target = $region29
  $region28: #{block_output_wrapper_forward.11} parent=0 // pred_region
    _
  $region29: #{block_output_wrapper_forward.11} parent=0 // pred_fallthru
    _

// kernel: block_output_wrapper_forward.13
$region0: #{block_output_wrapper_forward.13}
  #allocation0 [shape = 'u32[]', space=smem, size = 0x4, offset = 0x4, fixed_abs, tag = 'smem constant byte address 0x4 - core index']
  #allocation1 [shape = 'u32[144,128]{1,0:T(1,128)}', space=vmem, size = 0x12000, scoped, tag = 'internal scratch']
  %s0 = inlined_call_operand.vmem [shape: bf16[64,32], index: 0, kind: input, shape index: {}]
  %s1 = inlined_call_operand.vmem [shape: f32[1,32], index: 1, kind: input, shape index: {}]
  %s2 = inlined_call_operand.vmem [shape: bf16[32,128], index: 2, kind: input, shape index: {}]
  %s3 = inlined_call_operand.vmem [shape: f32[64,128], index: 3, kind: output, shape index: {}]
  %s4 = sld [smem:[#allocation0]]
  $region22: #{block_output_wrapper_forward.13} parent=0
    _
  %s6 = ssub.s32 1, %s4
  %s7 = scalar_select 0, %s6, %s4
  // Predicated region
  $region2: #{block_output_wrapper_forward.13} parent=0 // pred_check
    _
  $region3: #{block_output_wrapper_forward.13} parent=0 // pred_check_branch
    %9 = sbr.rel (0) target = $region5
  $region4: #{block_output_wrapper_forward.13} parent=0 // pred_region
    _
  $region5: #{block_output_wrapper_forward.13} parent=0 // pred_fallthru
    _
  // Predicated region
  $region6: #{block_output_wrapper_forward.13} parent=0 // pred_check
    _
  $region7: #{block_output_wrapper_forward.13} parent=0 // pred_check_branch
    %11 = sbr.rel (0) target = $region9
  $region8: #{block_output_wrapper_forward.13} parent=0 // pred_region
    _
  $region9: #{block_output_wrapper_forward.13} parent=0 // pred_fallthru
    _
  // Predicated region
  $region10: #{block_output_wrapper_forward.13} parent=0 // pred_check
    _
  $region11: #{block_output_wrapper_forward.13} parent=0 // pred_check_branch
    %13 = sbr.rel (0) target = $region13
  $region12: #{block_output_wrapper_forward.13} parent=0 // pred_region
    _
  $region13: #{block_output_wrapper_forward.13} parent=0 // pred_fallthru
    _
  %v15 = vld [vmem:[%s0] sm:$0xf]
  %v16 = vld [vmem:[%s0 + $0x4] sm:$0xf]
  %v17 = vld [vmem:[%s0 + $0x8] sm:$0xf]
  %v18 = vld [vmem:[%s0 + $0xc] sm:$0xf]
  %v19 = vld [vmem:[%s0 + $0x10] sm:$0xf]
  %v20 = vld [vmem:[%s0 + $0x14] sm:$0xf]
  %v21 = vld [vmem:[%s0 + $0x18] sm:$0xf]
  %v22 = vld [vmem:[%s0 + $0x1c] sm:$0xf]
  %v23 = vunpack.c.l.bf16 %v15
  %v24 = vunpack.c.l.bf16 %v16
  %v25 = vunpack.c.l.bf16 %v17
  %v26 = vunpack.c.l.bf16 %v18
  %v27 = vunpack.c.l.bf16 %v19
  %v28 = vunpack.c.l.bf16 %v20
  %v29 = vunpack.c.l.bf16 %v21
  %v30 = vunpack.c.l.bf16 %v22
  %v31 = vmul.f32 %v23, %v23
  %v32 = vmul.f32 %v24, %v24
  %v33 = vmul.f32 %v25, %v25
  %v34 = vmul.f32 %v26, %v26
  %v35 = vmul.f32 %v27, %v27
  %v36 = vmul.f32 %v28, %v28
  %v37 = vmul.f32 %v29, %v29
  %v38 = vmul.f32 %v30, %v30
  %vm39 = vcmask 261120
  %v40 = vsel %vm39, %v31, 0.0
  %41 = vadd.xlane.f32.xlu0 %v40
  %v42 = vpop.xlane.xlu0 %41
  %v43 = vsel %vm39, %v32, 0.0
  %44 = vadd.xlane.f32.xlu0 %v43
  %v45 = vpop.xlane.xlu0 %44
  %v46 = vsel %vm39, %v33, 0.0
  %47 = vadd.xlane.f32.xlu0 %v46
  %v48 = vpop.xlane.xlu0 %47
  %v49 = vsel %vm39, %v34, 0.0
  %50 = vadd.xlane.f32.xlu0 %v49
  %v51 = vpop.xlane.xlu0 %50
  %v52 = vsel %vm39, %v35, 0.0
  %53 = vadd.xlane.f32.xlu0 %v52
  %v54 = vpop.xlane.xlu0 %53
  %v55 = vsel %vm39, %v36, 0.0
  %56 = vadd.xlane.f32.xlu0 %v55
  %v57 = vpop.xlane.xlu0 %56
  %v58 = vsel %vm39, %v37, 0.0
  %59 = vadd.xlane.f32.xlu0 %v58
  %v60 = vpop.xlane.xlu0 %59
  %v61 = vsel %vm39, %v38, 0.0
  %62 = vadd.xlane.f32.xlu0 %v61
  %v63 = vpop.xlane.xlu0 %62
  %v64 = vrcp.pop 32.0
  %v65 = vmul.f32 %v42, %v64
  %v66 = vmul.f32 %v45, %v64
  %v67 = vmul.f32 %v48, %v64
  %v68 = vmul.f32 %v51, %v64
  %v69 = vmul.f32 %v54, %v64
  %v70 = vmul.f32 %v57, %v64
  %v71 = vmul.f32 %v60, %v64
  %v72 = vmul.f32 %v63, %v64
  %v73 = vadd.f32 %v65, 1e-06
  %v74 = vadd.f32 %v66, 1e-06
  %v75 = vadd.f32 %v67, 1e-06
  %v76 = vadd.f32 %v68, 1e-06
  %v77 = vadd.f32 %v69, 1e-06
  %v78 = vadd.f32 %v70, 1e-06
  %v79 = vadd.f32 %v71, 1e-06
  %v80 = vadd.f32 %v72, 1e-06
  %v81 = vrsqrt.pop %v73
  %v82 = vrsqrt.pop %v74
  %v83 = vrsqrt.pop %v75
  %v84 = vrsqrt.pop %v76
  %v85 = vrsqrt.pop %v77
  %v86 = vrsqrt.pop %v78
  %v87 = vrsqrt.pop %v79
  %v88 = vrsqrt.pop %v80
  %v89 = vmul.f32 %v23, %v81
  %v90 = vmul.f32 %v24, %v82
  %v91 = vmul.f32 %v25, %v83
  %v92 = vmul.f32 %v26, %v84
  %v93 = vmul.f32 %v27, %v85
  %v94 = vmul.f32 %v28, %v86
  %v95 = vmul.f32 %v29, %v87
  %v96 = vmul.f32 %v30, %v88
  %v97 = vld [vmem:[%s1] sm:$0x1]
  %v99 = vlaneseq
  %v100 = vshrl.u32 %v99, 7
  %v101 = vsub.s32 0, %v100
  %v102 = vrot.slane %v97, %v101
  %v104 = vmul.f32 %v89, %v102
  %v105 = vmul.f32 %v90, %v102
  %v106 = vmul.f32 %v91, %v102
  %v107 = vmul.f32 %v92, %v102
  %v108 = vmul.f32 %v93, %v102
  %v109 = vmul.f32 %v94, %v102
  %v110 = vmul.f32 %v95, %v102
  %v111 = vmul.f32 %v96, %v102
  %v112 = vpack.c.bf16 %v105, %v104
  %v113 = vpack.c.bf16 %v107, %v106
  %v114 = vpack.c.bf16 %v109, %v108
  %v115 = vpack.c.bf16 %v111, %v110
  %v116 = vld [vmem:[%s2] sm:$0xf]
  %v117 = vld [vmem:[%s2 + $0x4] sm:$0xf]
  %v118 = vld [vmem:[%s2 + $0x8] sm:$0xf]
  %v119 = vld [vmem:[%s2 + $0xc] sm:$0xf]
  %v124 = vunpack.c.l.b16 %v116
  %v125 = vunpack.c.l.b16 %v117
  %v126 = vunpack.c.l.b16 %v118
  %v127 = vunpack.c.l.b16 %v119
  %v128 = vpack.c.b16 %v125, %v124
  %v129 = vpack.c.b16 %v127, %v126
  %v133 = vsel %vm39, %v112, 0
  %v136 = vsel %vm39, %v113, 0
  %v139 = vsel %vm39, %v114, 0
  %v142 = vsel %vm39, %v115, 0
  %144 = vmatprep.subr.bf16.mxu0 0
  %145 = vmatpush1.bf16.msra.mxu0 %v128
  %146 = vmatprep.subr.bf16.mxu0 0
  %147 = vmatpush1.bf16.msra.mxu0 %v129
  %148 = vmatprep.subr.bf16.mxu0 0
  %149 = vmatpush1.bf16.msra.mxu0 0
  %150 = vmatprep.subr.bf16.mxu0 0
  %151 = vmatpush1.bf16.msra.mxu0 0
  %152 = vmatprep.subr.bf16.mxu0 0
  %153 = vmatpush1.bf16.msra.mxu0 0
  %154 = vmatprep.subr.bf16.mxu0 0
  %155 = vmatpush1.bf16.msra.mxu0 0
  %156 = vmatprep.subr.bf16.mxu0 0
  %157 = vmatpush1.bf16.msra.mxu0 0
  %158 = vmatprep.subr.bf16.mxu0 0
  %159 = vmatpush1.bf16.msra.mxu0 0
  %160 = vmatprep.subr.bf16.mxu0 0
  %161 = vmatpush1.bf16.msra.mxu0 0
  %162 = vmatprep.subr.bf16.mxu0 0
  %163 = vmatpush1.bf16.msra.mxu0 0
  %164 = vmatprep.subr.bf16.mxu0 0
  %165 = vmatpush1.bf16.msra.mxu0 0
  %166 = vmatprep.subr.bf16.mxu0 0
  %167 = vmatpush1.bf16.msra.mxu0 0
  %168 = vmatprep.subr.bf16.mxu0 0
  %169 = vmatpush1.bf16.msra.mxu0 0
  %170 = vmatprep.subr.bf16.mxu0 0
  %171 = vmatpush1.bf16.msra.mxu0 0
  %172 = vmatprep.subr.bf16.mxu0 0
  %173 = vmatpush1.bf16.msra.mxu0 0
  %174 = vmatprep.subr.bf16.mxu0 0
  %175 = vmatpush1.bf16.msra.mxu0 0
  %176 = vmatprep.mubr.bf16.mxu0 0
  %177 = vmatmul.mubr.bf16.gmra.mrb[0].mxu0 %v133
  %v178 = vpop.f32.mrb[0].mxu0
  %v179 = vadd.f32 0.0, %v178
  %v180 = vpop.f32.mrb[0].mxu0
  %v181 = vpop.f32.mrb[0].mxu0
  %v182 = vadd.f32 0.0, %v181
  %v183 = vpop.f32.mrb[0].mxu0
  %184 = vmatprep.mubr.bf16.mxu0 0
  %185 = vmatmul.mubr.bf16.gmra.mrb[0].mxu0 %v136
  %v186 = vpop.f32.mrb[0].mxu0
  %v187 = vadd.f32 0.0, %v186
  %v188 = vpop.f32.mrb[0].mxu0
  %v189 = vpop.f32.mrb[0].mxu0
  %v190 = vadd.f32 0.0, %v189
  %v191 = vpop.f32.mrb[0].mxu0
  %192 = vmatprep.mubr.bf16.mxu0 0
  %193 = vmatmul.mubr.bf16.gmra.mrb[0].mxu0 %v139
  %v194 = vpop.f32.mrb[0].mxu0
  %v195 = vadd.f32 0.0, %v194
  %v196 = vpop.f32.mrb[0].mxu0
  %v197 = vpop.f32.mrb[0].mxu0
  %v198 = vadd.f32 0.0, %v197
  %v199 = vpop.f32.mrb[0].mxu0
  %200 = vmatprep.mubr.bf16.mxu0 0
  %201 = vmatmul.mubr.bf16.gmra.mrb[0].mxu0 %v142
  %v202 = vpop.f32.mrb[0].mxu0
  %v203 = vadd.f32 0.0, %v202
  %v204 = vpop.f32.mrb[0].mxu0
  %v205 = vpop.f32.mrb[0].mxu0
  %v206 = vadd.f32 0.0, %v205
  %v207 = vpop.f32.mrb[0].mxu0
  %208 = vdwg.mxu0
  %209 = vst [vmem:[%s3] sm:$0xff] %v179
  %210 = vst [vmem:[%s3 + $0x8] sm:$0xff] %v182
  %211 = vst [vmem:[%s3 + $0x10] sm:$0xff] %v187
  %212 = vst [vmem:[%s3 + $0x18] sm:$0xff] %v190
  %213 = vst [vmem:[%s3 + $0x20] sm:$0xff] %v195
  %214 = vst [vmem:[%s3 + $0x28] sm:$0xff] %v198
  %215 = vst [vmem:[%s3 + $0x30] sm:$0xff] %v203
  %216 = vst [vmem:[%s3 + $0x38] sm:$0xff] %v206
  // Predicated region
  $region14: #{block_output_wrapper_forward.13} parent=0 // pred_check
    _
  $region15: #{block_output_wrapper_forward.13} parent=0 // pred_check_branch
    %218 = sbr.rel (0) target = $region17
  $region16: #{block_output_wrapper_forward.13} parent=0 // pred_region
    _
  $region17: #{block_output_wrapper_forward.13} parent=0 // pred_fallthru
    _
  // Predicated region
  $region18: #{block_output_wrapper_forward.13} parent=0 // pred_check
    _
  $region19: #{block_output_wrapper_forward.13} parent=0 // pred_check_branch
    %220 = sbr.rel (0) target = $region21
  $region20: #{block_output_wrapper_forward.13} parent=0 // pred_region
    _
  $region21: #{block_output_wrapper_forward.13} parent=0 // pred_fallthru
    _

// kernel: block_output_wrapper_forward.12
$region0: #{block_output_wrapper_forward.12}
  #allocation0 [shape = 'u32[]', space=smem, size = 0x4, offset = 0x4, fixed_abs, tag = 'smem constant byte address 0x4 - core index']
  #allocation1 [shape = 'u32[144,128]{1,0:T(1,128)}', space=vmem, size = 0x12000, scoped, tag = 'internal scratch']
  %s0 = inlined_call_operand.vmem [shape: bf16[16,32], index: 0, kind: input, shape index: {}]
  %s1 = inlined_call_operand.vmem [shape: f32[1,32], index: 1, kind: input, shape index: {}]
  %s2 = inlined_call_operand.hbm [shape: f32[16,32], index: 2, kind: output, shape index: {}]
  %s3 = sld [smem:[#allocation0]]
  $region18: #{block_output_wrapper_forward.12} parent=0
    _
  %s5 = ssub.s32 1, %s3
  %s6 = scalar_select 0, %s5, %s3
  $region1: #{block_output_wrapper_forward.12} parent=0
    #allocation2 [shape = 'u8[8192]{0}', space=vmem, size = 0x2000, scoped, tag = 'output window, operand 0, single buffered']
    #allocation3 [shape = 's32[1]{0}', space=sflag, size = 0x4, scoped, tag = 'scoped memory for block_output_wrapper_forward.12']
    %7 = vsyncpa [#allocation3], 0
    // Predicated region
    $region2: #{block_output_wrapper_forward.12} parent=1 // pred_check
      _
    $region3: #{block_output_wrapper_forward.12} parent=1 // pred_check_branch
      %9 = sbr.rel (0) target = $region5
    $region4: #{block_output_wrapper_forward.12} parent=1 // pred_region
      _
    $region5: #{block_output_wrapper_forward.12} parent=1 // pred_fallthru
      _
    // Predicated region
    $region6: #{block_output_wrapper_forward.12} parent=1 // pred_check
      _
    $region7: #{block_output_wrapper_forward.12} parent=1 // pred_check_branch
      %11 = sbr.rel (0) target = $region9
    $region8: #{block_output_wrapper_forward.12} parent=1 // pred_region
      _
    $region9: #{block_output_wrapper_forward.12} parent=1 // pred_fallthru
      _
    %v12 = vld [vmem:[%s0] sm:$0xf]
    %v13 = vld [vmem:[%s0 + $0x4] sm:$0xf]
    %v14 = vunpack.c.l.bf16 %v12
    %v15 = vunpack.c.l.bf16 %v13
    %v16 = vmul.f32 %v14, %v14
    %v17 = vmul.f32 %v15, %v15
    %vm18 = vcmask 261120
    %v19 = vsel %vm18, %v16, 0.0
    %20 = vadd.xlane.f32.xlu0 %v19
    %v21 = vpop.xlane.xlu0 %20
    %v22 = vsel %vm18, %v17, 0.0
    %23 = vadd.xlane.f32.xlu0 %v22
    %v24 = vpop.xlane.xlu0 %23
    %v25 = vrcp.pop 32.0
    %v26 = vmul.f32 %v21, %v25
    %v27 = vmul.f32 %v24, %v25
    %v28 = vadd.f32 %v26, 1e-06
    %v29 = vadd.f32 %v27, 1e-06
    %v30 = vrsqrt.pop %v28
    %v31 = vrsqrt.pop %v29
    %v32 = vmul.f32 %v14, %v30
    %v33 = vmul.f32 %v15, %v31
    %v34 = vld [vmem:[%s1] sm:$0x1]
    %v36 = vlaneseq
    %v37 = vshrl.u32 %v36, 7
    %v38 = vsub.s32 0, %v37
    %v39 = vrot.slane %v34, %v38
    %v41 = vmul.f32 %v32, %v39
    %v42 = vmul.f32 %v33, %v39
    %43 = vst.msk [vmem:[#allocation2] sm:$0xff] %vm18, %v41
    %44 = vst.msk [vmem:[#allocation2 + $0x8] sm:$0xff] %vm18, %v42
    // Predicated region
    $region10: #{block_output_wrapper_forward.12} parent=1 // pred_check
      _
    $region11: #{block_output_wrapper_forward.12} parent=1 // pred_check_branch
      %46 = sbr.rel (0) target = $region13
    $region12: #{block_output_wrapper_forward.12} parent=1 // pred_region
      %s48 = ssub.s32 256, 256
      %49 = vsyncadd [#allocation3], %s48
      %s50 = sshll.u32 [#allocation2], 4
      %s51 = int_to_ptr.vmem [resolvable:$true] %s50
      %56 = dma.vmem_to_hbm [thread:$0]  %s51, 256, %s2, [#allocation3], 128, 128, 8
    $region13: #{block_output_wrapper_forward.12} parent=1 // pred_fallthru
      _
    // Predicated region
    $region14: #{block_output_wrapper_forward.12} parent=1 // pred_check
      _
    $region15: #{block_output_wrapper_forward.12} parent=1 // pred_check_branch
      %58 = sbr.rel (0) target = $region17
    $region16: #{block_output_wrapper_forward.12} parent=1 // pred_region
      %59 = dma.done [#allocation3], 256
    $region17: #{block_output_wrapper_forward.12} parent=1 // pred_fallthru
      _
    %60 = vsyncpa [#allocation3], 1

</llo_original>
